<compile_context>
chip_gen: v7x
topology: tpu7x:2x2x1
jax: 0.10.0
libtpu: 0.0.40
codegen_flags: <defaults>
</compile_context>

<pallas_src>
import functools

import jax
import jax.numpy as jnp
from jax import lax
from jax.experimental import pallas as pl
from jax.experimental.pallas import tpu as pltpu

EMB_DIM = 32
NUM_HEADS = 4
HEAD_DIM = EMB_DIM // NUM_HEADS
SCALING = HEAD_DIM ** (-0.5)


def mha_kernel(x_ref, wqkv_ref, bqkv_ref, wo_ref, bo_ref, o_ref, *,
               bblk, seq_len):
    """One grid step processes `bblk` batch elements (bblk*seq_len rows)."""
    E = EMB_DIM
    x = x_ref[...]                                   # (bblk*S, E)

    # Fused (pre-scaled) Q|K|V projection: single MXU matmul, 3E output cols.
    qkv = jnp.dot(x, wqkv_ref[...],
                  preferred_element_type=jnp.float32) + bqkv_ref[...]  # (rows, 3E)

    wo = wo_ref[...]                                 # (E, E)
    bo = bo_ref[...]                                 # (1, E)

    # Static unroll over batch elements in this block and over heads.
    for b in range(bblk):
        rlo = b * seq_len
        rhi = rlo + seq_len

        acc = jnp.zeros((seq_len, E), dtype=jnp.float32)
        for h in range(NUM_HEADS):
            clo = h * HEAD_DIM
            chi = clo + HEAD_DIM
            qh = qkv[rlo:rhi, clo:chi]                   # (S, D), already scaled
            kh = qkv[rlo:rhi, E + clo:E + chi]           # (S, D)
            vh = qkv[rlo:rhi, 2 * E + clo:2 * E + chi]   # (S, D)

            # Contract last dims of both operands -> (S, S); the transpose is
            # absorbed into the MXU contraction (no XLU transpose of K).
            scores = lax.dot_general(
                qh, kh, (((1,), (1,)), ((), ())),
                preferred_element_type=jnp.float32)

            m = jnp.max(scores, axis=-1, keepdims=True)
            e = jnp.exp(scores - m)
            p = e * pl.reciprocal(jnp.sum(e, axis=-1, keepdims=True),
                                  approx=False)
            # dropout: identity (eval mode)

            ctx_h = jnp.dot(p, vh, preferred_element_type=jnp.float32)  # (S, D)
            # Equivalent to concat(ctx_h over h) @ Wo, without the lane-axis
            # concatenate: fold the output projection into the head loop.
            acc = acc + jnp.dot(ctx_h, wo[clo:chi, :],
                                preferred_element_type=jnp.float32)

        o_ref[rlo:rhi, :] = (acc + bo).astype(o_ref.dtype)


def multi_head_attention(x, params, *, bblk=None):
    """x: (B, S, E) float32 -> (B, S, E) float32."""
    B, S, E = x.shape
    wq, bq, wk, bk, wv, bv, wo, bo = params

    # Fuse QKV weights/biases in the wrapper (one-time XLA concat, outside the
    # kernel's hot path). Fold the attention scale into the Q projection so
    # the kernel never multiplies by it.
    wqkv = jnp.concatenate([wq * SCALING, wk, wv], axis=1)   # (E, 3E)
    bqkv = jnp.concatenate([bq * SCALING, bk, bv], axis=1)   # (1, 3E)

    if bblk is None:
        # Smallest divisor of B giving >= 64 rows per block (good MXU sublane
        # fill) while keeping the grid extent as large as possible (so the
        # "parallel" batch axis can be sharded across TensorCores on v7x).
        # For the tiny test shapes this collapses to a single grid step.
        bblk = B
        for cand in range(1, B + 1):
            if B % cand == 0 and cand * S >= 64:
                bblk = cand
                break
    assert B % bblk == 0
    nblk = B // bblk
    rows = bblk * S                                  # multiple of 8 (S=8)

    # Present activations/outputs as dense 2-D (B*S, E) slabs.
    x2 = x.reshape(B * S, E)

    kernel = functools.partial(mha_kernel, bblk=bblk, seq_len=S)

    out = pl.pallas_call(
        kernel,
        out_shape=jax.ShapeDtypeStruct((B * S, E), x.dtype),
        grid_spec=pltpu.PrefetchScalarGridSpec(
            num_scalar_prefetch=0,
            grid=(nblk,),
            in_specs=[
                pl.BlockSpec((rows, E), lambda i: (i, 0)),        # x rows
                pl.BlockSpec((E, 3 * E), lambda i: (0, 0)),       # Wqkv (pre-scaled Q)
                pl.BlockSpec((1, 3 * E), lambda i: (0, 0)),       # bqkv
                pl.BlockSpec((E, E), lambda i: (0, 0)),           # Wo
                pl.BlockSpec((1, E), lambda i: (0, 0)),           # bo
            ],
            out_specs=pl.BlockSpec((rows, E), lambda i: (i, 0)),
        ),
        compiler_params=pltpu.CompilerParams(
            dimension_semantics=("parallel",)),
    )(x2, wqkv, bqkv, wo, bo)

    return out.reshape(B, S, E)


def init_params(key, emb_dim):
    # Deterministic init mimicking nn.Linear: uniform(-1/sqrt(fan_in), 1/sqrt(fan_in)).
    bound = 1.0 / (emb_dim ** 0.5)
    keys = jax.random.split(key, 8)
    params = []
    for i in range(4):  # query, key, value, output linear
        w = jax.random.uniform(keys[2 * i], (emb_dim, emb_dim),
                               minval=-bound, maxval=bound, dtype=jnp.float32)
        b = jax.random.uniform(keys[2 * i + 1], (1, emb_dim),
                               minval=-bound, maxval=bound, dtype=jnp.float32)
        params.extend([w, b])
    return tuple(params)


def reference(x, params):
    wq, bq, wk, bk, wv, bv, wo, bo = params
    B, S, E = x.shape
    q = x @ wq + bq
    k = x @ wk + bk
    v = x @ wv + bv
    q = q.reshape(B, S, NUM_HEADS, HEAD_DIM).transpose(0, 2, 1, 3)
    k = k.reshape(B, S, NUM_HEADS, HEAD_DIM).transpose(0, 2, 1, 3)
    v = v.reshape(B, S, NUM_HEADS, HEAD_DIM).transpose(0, 2, 1, 3)
    attn = jnp.einsum('bhqd,bhkd->bhqk', q, k) * SCALING
    attn = jax.nn.softmax(attn, axis=-1)
    ctx = jnp.einsum('bhqk,bhkd->bhqd', attn, v)
    ctx = ctx.transpose(0, 2, 1, 3).reshape(B, S, E)
    return ctx @ wo + bo


if __name__ == "__main__":
    key = jax.random.PRNGKey(0)
    k_x, k_p = jax.random.split(key)

    B, S = 2, 8
    x = jax.random.normal(k_x, (B, S, EMB_DIM), dtype=jnp.float32)
    params = init_params(k_p, EMB_DIM)

    out = multi_head_attention(x, params)
    out = jax.block_until_ready(out)

    ref = reference(x, params)
    assert out.shape == (B, S, EMB_DIM)
    assert jnp.allclose(out, ref, atol=1e-5, rtol=1e-5)

    print("KERNEL_OK")
</pallas_src>

<mosaic_0001>
module attributes {stable_mosaic.version = 11 : i64} {
  func.func @mha_kernel(%arg0: i32, %arg1: memref<16x32xf32, #tpu.memory_space<vmem>>, %arg2: memref<32x96xf32, #tpu.memory_space<vmem>>, %arg3: memref<1x96xf32, #tpu.memory_space<vmem>>, %arg4: memref<32x32xf32, #tpu.memory_space<vmem>>, %arg5: memref<1x32xf32, #tpu.memory_space<vmem>>, %arg6: memref<16x32xf32, #tpu.memory_space<vmem>>) attributes {dimension_semantics = [#tpu.dimension_semantics<parallel>], iteration_bounds = array<i64: 1>, scalar_prefetch = 0 : i64, scratch_operands = 0 : i64, tpu.core_type = #tpu.core_type<tc>, window_params = [{transform_indices = @transform_0, window_bounds = array<i64: 16, 32>}, {pipeline_mode = #tpu.pipeline_mode<synchronous>, transform_indices = @transform_1, window_bounds = array<i64: 32, 96>}, {pipeline_mode = #tpu.pipeline_mode<synchronous>, transform_indices = @transform_2, window_bounds = array<i64: 1, 96>}, {pipeline_mode = #tpu.pipeline_mode<synchronous>, transform_indices = @transform_3, window_bounds = array<i64: 32, 32>}, {pipeline_mode = #tpu.pipeline_mode<synchronous>, transform_indices = @transform_4, window_bounds = array<i64: 1, 32>}, {transform_indices = @transform_5, window_bounds = array<i64: 16, 32>}]} {
    %c0 = arith.constant 0 : index
    %c0_0 = arith.constant 0 : index
    %0 = vector.load %arg1[%c0, %c0_0] : memref<16x32xf32, #tpu.memory_space<vmem>>, vector<16x32xf32>
    %c0_1 = arith.constant 0 : index
    %c0_2 = arith.constant 0 : index
    %1 = vector.load %arg2[%c0_1, %c0_2] : memref<32x96xf32, #tpu.memory_space<vmem>>, vector<32x96xf32>
    %cst = arith.constant dense<0.000000e+00> : vector<16x96xf32>
    %2 = tpu.matmul %0, %1, %cst {dimension_numbers = #tpu.dot_dimension_numbers<[1], [0], [0], [1], [0, 0, 1, 1], [], []>} : vector<16x32xf32>, vector<32x96xf32>, vector<16x96xf32> -> vector<16x96xf32>
    %c0_3 = arith.constant 0 : index
    %c0_4 = arith.constant 0 : index
    %3 = vector.load %arg3[%c0_3, %c0_4] : memref<1x96xf32, #tpu.memory_space<vmem>>, vector<1x96xf32>
    %4 = vector.broadcast %3 : vector<1x96xf32> to vector<16x96xf32>
    %5 = arith.addf %2, %4 : vector<16x96xf32>
    %c0_5 = arith.constant 0 : index
    %c0_6 = arith.constant 0 : index
    %6 = vector.load %arg4[%c0_5, %c0_6] : memref<32x32xf32, #tpu.memory_space<vmem>>, vector<32x32xf32>
    %c0_7 = arith.constant 0 : index
    %c0_8 = arith.constant 0 : index
    %7 = vector.load %arg5[%c0_7, %c0_8] : memref<1x32xf32, #tpu.memory_space<vmem>>, vector<1x32xf32>
    %cst_9 = arith.constant 0.000000e+00 : f32
    %8 = vector.broadcast %cst_9 : f32 to vector<8x32xf32>
    %9 = vector.extract_strided_slice %5 {offsets = [0, 0], sizes = [8, 8], strides = [1, 1]} : vector<16x96xf32> to vector<8x8xf32>
    %10 = vector.extract_strided_slice %5 {offsets = [0, 32], sizes = [8, 8], strides = [1, 1]} : vector<16x96xf32> to vector<8x8xf32>
    %11 = vector.extract_strided_slice %5 {offsets = [0, 64], sizes = [8, 8], strides = [1, 1]} : vector<16x96xf32> to vector<8x8xf32>
    %cst_10 = arith.constant dense<0.000000e+00> : vector<8x8xf32>
    %12 = tpu.matmul %9, %10, %cst_10 {dimension_numbers = #tpu.dot_dimension_numbers<[1], [1], [0], [0], [0, 0, 1, 0], [], []>} : vector<8x8xf32>, vector<8x8xf32>, vector<8x8xf32> -> vector<8x8xf32>
    %cst_11 = arith.constant dense<0xFF800000> : vector<8xf32>
    %13 = vector.multi_reduction <maximumf>, %12, %cst_11 [1] : vector<8x8xf32> to vector<8xf32>
    %14 = vector.shape_cast %13 : vector<8xf32> to vector<8x1xf32>
    %15 = vector.broadcast %14 : vector<8x1xf32> to vector<8x8xf32>
    %16 = arith.subf %12, %15 : vector<8x8xf32>
    %17 = math.exp %16 : vector<8x8xf32>
    %cst_12 = arith.constant dense<0.000000e+00> : vector<8xf32>
    %18 = vector.multi_reduction <add>, %17, %cst_12 [1] : vector<8x8xf32> to vector<8xf32>
    %19 = vector.shape_cast %18 : vector<8xf32> to vector<8x1xf32>
    %20 = tpu.reciprocal %19 : vector<8x1xf32> -> vector<8x1xf32>
    %21 = vector.broadcast %20 : vector<8x1xf32> to vector<8x8xf32>
    %22 = arith.mulf %17, %21 : vector<8x8xf32>
    %cst_13 = arith.constant dense<0.000000e+00> : vector<8x8xf32>
    %23 = tpu.matmul %22, %11, %cst_13 {dimension_numbers = #tpu.dot_dimension_numbers<[1], [0], [0], [1], [0, 0, 1, 1], [], []>} : vector<8x8xf32>, vector<8x8xf32>, vector<8x8xf32> -> vector<8x8xf32>
    %24 = vector.extract_strided_slice %6 {offsets = [0, 0], sizes = [8, 32], strides = [1, 1]} : vector<32x32xf32> to vector<8x32xf32>
    %cst_14 = arith.constant dense<0.000000e+00> : vector<8x32xf32>
    %25 = tpu.matmul %23, %24, %cst_14 {dimension_numbers = #tpu.dot_dimension_numbers<[1], [0], [0], [1], [0, 0, 1, 1], [], []>} : vector<8x8xf32>, vector<8x32xf32>, vector<8x32xf32> -> vector<8x32xf32>
    %26 = arith.addf %8, %25 : vector<8x32xf32>
    %27 = vector.extract_strided_slice %5 {offsets = [0, 8], sizes = [8, 8], strides = [1, 1]} : vector<16x96xf32> to vector<8x8xf32>
    %28 = vector.extract_strided_slice %5 {offsets = [0, 40], sizes = [8, 8], strides = [1, 1]} : vector<16x96xf32> to vector<8x8xf32>
    %29 = vector.extract_strided_slice %5 {offsets = [0, 72], sizes = [8, 8], strides = [1, 1]} : vector<16x96xf32> to vector<8x8xf32>
    %cst_15 = arith.constant dense<0.000000e+00> : vector<8x8xf32>
    %30 = tpu.matmul %27, %28, %cst_15 {dimension_numbers = #tpu.dot_dimension_numbers<[1], [1], [0], [0], [0, 0, 1, 0], [], []>} : vector<8x8xf32>, vector<8x8xf32>, vector<8x8xf32> -> vector<8x8xf32>
    %cst_16 = arith.constant dense<0xFF800000> : vector<8xf32>
    %31 = vector.multi_reduction <maximumf>, %30, %cst_16 [1] : vector<8x8xf32> to vector<8xf32>
    %32 = vector.shape_cast %31 : vector<8xf32> to vector<8x1xf32>
    %33 = vector.broadcast %32 : vector<8x1xf32> to vector<8x8xf32>
    %34 = arith.subf %30, %33 : vector<8x8xf32>
    %35 = math.exp %34 : vector<8x8xf32>
    %cst_17 = arith.constant dense<0.000000e+00> : vector<8xf32>
    %36 = vector.multi_reduction <add>, %35, %cst_17 [1] : vector<8x8xf32> to vector<8xf32>
    %37 = vector.shape_cast %36 : vector<8xf32> to vector<8x1xf32>
    %38 = tpu.reciprocal %37 : vector<8x1xf32> -> vector<8x1xf32>
    %39 = vector.broadcast %38 : vector<8x1xf32> to vector<8x8xf32>
    %40 = arith.mulf %35, %39 : vector<8x8xf32>
    %cst_18 = arith.constant dense<0.000000e+00> : vector<8x8xf32>
    %41 = tpu.matmul %40, %29, %cst_18 {dimension_numbers = #tpu.dot_dimension_numbers<[1], [0], [0], [1], [0, 0, 1, 1], [], []>} : vector<8x8xf32>, vector<8x8xf32>, vector<8x8xf32> -> vector<8x8xf32>
    %42 = vector.extract_strided_slice %6 {offsets = [8, 0], sizes = [8, 32], strides = [1, 1]} : vector<32x32xf32> to vector<8x32xf32>
    %cst_19 = arith.constant dense<0.000000e+00> : vector<8x32xf32>
    %43 = tpu.matmul %41, %42, %cst_19 {dimension_numbers = #tpu.dot_dimension_numbers<[1], [0], [0], [1], [0, 0, 1, 1], [], []>} : vector<8x8xf32>, vector<8x32xf32>, vector<8x32xf32> -> vector<8x32xf32>
    %44 = arith.addf %26, %43 : vector<8x32xf32>
    %45 = vector.extract_strided_slice %5 {offsets = [0, 16], sizes = [8, 8], strides = [1, 1]} : vector<16x96xf32> to vector<8x8xf32>
    %46 = vector.extract_strided_slice %5 {offsets = [0, 48], sizes = [8, 8], strides = [1, 1]} : vector<16x96xf32> to vector<8x8xf32>
    %47 = vector.extract_strided_slice %5 {offsets = [0, 80], sizes = [8, 8], strides = [1, 1]} : vector<16x96xf32> to vector<8x8xf32>
    %cst_20 = arith.constant dense<0.000000e+00> : vector<8x8xf32>
    %48 = tpu.matmul %45, %46, %cst_20 {dimension_numbers = #tpu.dot_dimension_numbers<[1], [1], [0], [0], [0, 0, 1, 0], [], []>} : vector<8x8xf32>, vector<8x8xf32>, vector<8x8xf32> -> vector<8x8xf32>
    %cst_21 = arith.constant dense<0xFF800000> : vector<8xf32>
    %49 = vector.multi_reduction <maximumf>, %48, %cst_21 [1] : vector<8x8xf32> to vector<8xf32>
    %50 = vector.shape_cast %49 : vector<8xf32> to vector<8x1xf32>
    %51 = vector.broadcast %50 : vector<8x1xf32> to vector<8x8xf32>
    %52 = arith.subf %48, %51 : vector<8x8xf32>
    %53 = math.exp %52 : vector<8x8xf32>
    %cst_22 = arith.constant dense<0.000000e+00> : vector<8xf32>
    %54 = vector.multi_reduction <add>, %53, %cst_22 [1] : vector<8x8xf32> to vector<8xf32>
    %55 = vector.shape_cast %54 : vector<8xf32> to vector<8x1xf32>
    %56 = tpu.reciprocal %55 : vector<8x1xf32> -> vector<8x1xf32>
    %57 = vector.broadcast %56 : vector<8x1xf32> to vector<8x8xf32>
    %58 = arith.mulf %53, %57 : vector<8x8xf32>
    %cst_23 = arith.constant dense<0.000000e+00> : vector<8x8xf32>
    %59 = tpu.matmul %58, %47, %cst_23 {dimension_numbers = #tpu.dot_dimension_numbers<[1], [0], [0], [1], [0, 0, 1, 1], [], []>} : vector<8x8xf32>, vector<8x8xf32>, vector<8x8xf32> -> vector<8x8xf32>
    %60 = vector.extract_strided_slice %6 {offsets = [16, 0], sizes = [8, 32], strides = [1, 1]} : vector<32x32xf32> to vector<8x32xf32>
    %cst_24 = arith.constant dense<0.000000e+00> : vector<8x32xf32>
    %61 = tpu.matmul %59, %60, %cst_24 {dimension_numbers = #tpu.dot_dimension_numbers<[1], [0], [0], [1], [0, 0, 1, 1], [], []>} : vector<8x8xf32>, vector<8x32xf32>, vector<8x32xf32> -> vector<8x32xf32>
    %62 = arith.addf %44, %61 : vector<8x32xf32>
    %63 = vector.extract_strided_slice %5 {offsets = [0, 24], sizes = [8, 8], strides = [1, 1]} : vector<16x96xf32> to vector<8x8xf32>
    %64 = vector.extract_strided_slice %5 {offsets = [0, 56], sizes = [8, 8], strides = [1, 1]} : vector<16x96xf32> to vector<8x8xf32>
    %65 = vector.extract_strided_slice %5 {offsets = [0, 88], sizes = [8, 8], strides = [1, 1]} : vector<16x96xf32> to vector<8x8xf32>
    %cst_25 = arith.constant dense<0.000000e+00> : vector<8x8xf32>
    %66 = tpu.matmul %63, %64, %cst_25 {dimension_numbers = #tpu.dot_dimension_numbers<[1], [1], [0], [0], [0, 0, 1, 0], [], []>} : vector<8x8xf32>, vector<8x8xf32>, vector<8x8xf32> -> vector<8x8xf32>
    %cst_26 = arith.constant dense<0xFF800000> : vector<8xf32>
    %67 = vector.multi_reduction <maximumf>, %66, %cst_26 [1] : vector<8x8xf32> to vector<8xf32>
    %68 = vector.shape_cast %67 : vector<8xf32> to vector<8x1xf32>
    %69 = vector.broadcast %68 : vector<8x1xf32> to vector<8x8xf32>
    %70 = arith.subf %66, %69 : vector<8x8xf32>
    %71 = math.exp %70 : vector<8x8xf32>
    %cst_27 = arith.constant dense<0.000000e+00> : vector<8xf32>
    %72 = vector.multi_reduction <add>, %71, %cst_27 [1] : vector<8x8xf32> to vector<8xf32>
    %73 = vector.shape_cast %72 : vector<8xf32> to vector<8x1xf32>
    %74 = tpu.reciprocal %73 : vector<8x1xf32> -> vector<8x1xf32>
    %75 = vector.broadcast %74 : vector<8x1xf32> to vector<8x8xf32>
    %76 = arith.mulf %71, %75 : vector<8x8xf32>
    %cst_28 = arith.constant dense<0.000000e+00> : vector<8x8xf32>
    %77 = tpu.matmul %76, %65, %cst_28 {dimension_numbers = #tpu.dot_dimension_numbers<[1], [0], [0], [1], [0, 0, 1, 1], [], []>} : vector<8x8xf32>, vector<8x8xf32>, vector<8x8xf32> -> vector<8x8xf32>
    %78 = vector.extract_strided_slice %6 {offsets = [24, 0], sizes = [8, 32], strides = [1, 1]} : vector<32x32xf32> to vector<8x32xf32>
    %cst_29 = arith.constant dense<0.000000e+00> : vector<8x32xf32>
    %79 = tpu.matmul %77, %78, %cst_29 {dimension_numbers = #tpu.dot_dimension_numbers<[1], [0], [0], [1], [0, 0, 1, 1], [], []>} : vector<8x8xf32>, vector<8x32xf32>, vector<8x32xf32> -> vector<8x32xf32>
    %80 = arith.addf %62, %79 : vector<8x32xf32>
    %81 = vector.broadcast %7 : vector<1x32xf32> to vector<8x32xf32>
    %82 = arith.addf %80, %81 : vector<8x32xf32>
    %c0_30 = arith.constant 0 : index
    %c0_31 = arith.constant 0 : index
    %83 = vector.load %arg6[%c0_30, %c0_31] : memref<16x32xf32, #tpu.memory_space<vmem>>, vector<8x32xf32>
    tpu.vector_store %arg6[%c0_30, %c0_31], %82 {strides = array<i32>} : memref<16x32xf32, #tpu.memory_space<vmem>>, vector<8x32xf32>,
    %cst_32 = arith.constant 0.000000e+00 : f32
    %84 = vector.broadcast %cst_32 : f32 to vector<8x32xf32>
    %85 = vector.extract_strided_slice %5 {offsets = [8, 0], sizes = [8, 8], strides = [1, 1]} : vector<16x96xf32> to vector<8x8xf32>
    %86 = vector.extract_strided_slice %5 {offsets = [8, 32], sizes = [8, 8], strides = [1, 1]} : vector<16x96xf32> to vector<8x8xf32>
    %87 = vector.extract_strided_slice %5 {offsets = [8, 64], sizes = [8, 8], strides = [1, 1]} : vector<16x96xf32> to vector<8x8xf32>
    %cst_33 = arith.constant dense<0.000000e+00> : vector<8x8xf32>
    %88 = tpu.matmul %85, %86, %cst_33 {dimension_numbers = #tpu.dot_dimension_numbers<[1], [1], [0], [0], [0, 0, 1, 0], [], []>} : vector<8x8xf32>, vector<8x8xf32>, vector<8x8xf32> -> vector<8x8xf32>
    %cst_34 = arith.constant dense<0xFF800000> : vector<8xf32>
    %89 = vector.multi_reduction <maximumf>, %88, %cst_34 [1] : vector<8x8xf32> to vector<8xf32>
    %90 = vector.shape_cast %89 : vector<8xf32> to vector<8x1xf32>
    %91 = vector.broadcast %90 : vector<8x1xf32> to vector<8x8xf32>
    %92 = arith.subf %88, %91 : vector<8x8xf32>
    %93 = math.exp %92 : vector<8x8xf32>
    %cst_35 = arith.constant dense<0.000000e+00> : vector<8xf32>
    %94 = vector.multi_reduction <add>, %93, %cst_35 [1] : vector<8x8xf32> to vector<8xf32>
    %95 = vector.shape_cast %94 : vector<8xf32> to vector<8x1xf32>
    %96 = tpu.reciprocal %95 : vector<8x1xf32> -> vector<8x1xf32>
    %97 = vector.broadcast %96 : vector<8x1xf32> to vector<8x8xf32>
    %98 = arith.mulf %93, %97 : vector<8x8xf32>
    %cst_36 = arith.constant dense<0.000000e+00> : vector<8x8xf32>
    %99 = tpu.matmul %98, %87, %cst_36 {dimension_numbers = #tpu.dot_dimension_numbers<[1], [0], [0], [1], [0, 0, 1, 1], [], []>} : vector<8x8xf32>, vector<8x8xf32>, vector<8x8xf32> -> vector<8x8xf32>
    %100 = vector.extract_strided_slice %6 {offsets = [0, 0], sizes = [8, 32], strides = [1, 1]} : vector<32x32xf32> to vector<8x32xf32>
    %cst_37 = arith.constant dense<0.000000e+00> : vector<8x32xf32>
    %101 = tpu.matmul %99, %100, %cst_37 {dimension_numbers = #tpu.dot_dimension_numbers<[1], [0], [0], [1], [0, 0, 1, 1], [], []>} : vector<8x8xf32>, vector<8x32xf32>, vector<8x32xf32> -> vector<8x32xf32>
    %102 = arith.addf %84, %101 : vector<8x32xf32>
    %103 = vector.extract_strided_slice %5 {offsets = [8, 8], sizes = [8, 8], strides = [1, 1]} : vector<16x96xf32> to vector<8x8xf32>
    %104 = vector.extract_strided_slice %5 {offsets = [8, 40], sizes = [8, 8], strides = [1, 1]} : vector<16x96xf32> to vector<8x8xf32>
    %105 = vector.extract_strided_slice %5 {offsets = [8, 72], sizes = [8, 8], strides = [1, 1]} : vector<16x96xf32> to vector<8x8xf32>
    %cst_38 = arith.constant dense<0.000000e+00> : vector<8x8xf32>
    %106 = tpu.matmul %103, %104, %cst_38 {dimension_numbers = #tpu.dot_dimension_numbers<[1], [1], [0], [0], [0, 0, 1, 0], [], []>} : vector<8x8xf32>, vector<8x8xf32>, vector<8x8xf32> -> vector<8x8xf32>
    %cst_39 = arith.constant dense<0xFF800000> : vector<8xf32>
    %107 = vector.multi_reduction <maximumf>, %106, %cst_39 [1] : vector<8x8xf32> to vector<8xf32>
    %108 = vector.shape_cast %107 : vector<8xf32> to vector<8x1xf32>
    %109 = vector.broadcast %108 : vector<8x1xf32> to vector<8x8xf32>
    %110 = arith.subf %106, %109 : vector<8x8xf32>
    %111 = math.exp %110 : vector<8x8xf32>
    %cst_40 = arith.constant dense<0.000000e+00> : vector<8xf32>
    %112 = vector.multi_reduction <add>, %111, %cst_40 [1] : vector<8x8xf32> to vector<8xf32>
    %113 = vector.shape_cast %112 : vector<8xf32> to vector<8x1xf32>
    %114 = tpu.reciprocal %113 : vector<8x1xf32> -> vector<8x1xf32>
    %115 = vector.broadcast %114 : vector<8x1xf32> to vector<8x8xf32>
    %116 = arith.mulf %111, %115 : vector<8x8xf32>
    %cst_41 = arith.constant dense<0.000000e+00> : vector<8x8xf32>
    %117 = tpu.matmul %116, %105, %cst_41 {dimension_numbers = #tpu.dot_dimension_numbers<[1], [0], [0], [1], [0, 0, 1, 1], [], []>} : vector<8x8xf32>, vector<8x8xf32>, vector<8x8xf32> -> vector<8x8xf32>
    %118 = vector.extract_strided_slice %6 {offsets = [8, 0], sizes = [8, 32], strides = [1, 1]} : vector<32x32xf32> to vector<8x32xf32>
    %cst_42 = arith.constant dense<0.000000e+00> : vector<8x32xf32>
    %119 = tpu.matmul %117, %118, %cst_42 {dimension_numbers = #tpu.dot_dimension_numbers<[1], [0], [0], [1], [0, 0, 1, 1], [], []>} : vector<8x8xf32>, vector<8x32xf32>, vector<8x32xf32> -> vector<8x32xf32>
    %120 = arith.addf %102, %119 : vector<8x32xf32>
    %121 = vector.extract_strided_slice %5 {offsets = [8, 16], sizes = [8, 8], strides = [1, 1]} : vector<16x96xf32> to vector<8x8xf32>
    %122 = vector.extract_strided_slice %5 {offsets = [8, 48], sizes = [8, 8], strides = [1, 1]} : vector<16x96xf32> to vector<8x8xf32>
    %123 = vector.extract_strided_slice %5 {offsets = [8, 80], sizes = [8, 8], strides = [1, 1]} : vector<16x96xf32> to vector<8x8xf32>
    %cst_43 = arith.constant dense<0.000000e+00> : vector<8x8xf32>
    %124 = tpu.matmul %121, %122, %cst_43 {dimension_numbers = #tpu.dot_dimension_numbers<[1], [1], [0], [0], [0, 0, 1, 0], [], []>} : vector<8x8xf32>, vector<8x8xf32>, vector<8x8xf32> -> vector<8x8xf32>
    %cst_44 = arith.constant dense<0xFF800000> : vector<8xf32>
    %125 = vector.multi_reduction <maximumf>, %124, %cst_44 [1] : vector<8x8xf32> to vector<8xf32>
    %126 = vector.shape_cast %125 : vector<8xf32> to vector<8x1xf32>
    %127 = vector.broadcast %126 : vector<8x1xf32> to vector<8x8xf32>
    %128 = arith.subf %124, %127 : vector<8x8xf32>
    %129 = math.exp %128 : vector<8x8xf32>
    %cst_45 = arith.constant dense<0.000000e+00> : vector<8xf32>
    %130 = vector.multi_reduction <add>, %129, %cst_45 [1] : vector<8x8xf32> to vector<8xf32>
    %131 = vector.shape_cast %130 : vector<8xf32> to vector<8x1xf32>
    %132 = tpu.reciprocal %131 : vector<8x1xf32> -> vector<8x1xf32>
    %133 = vector.broadcast %132 : vector<8x1xf32> to vector<8x8xf32>
    %134 = arith.mulf %129, %133 : vector<8x8xf32>
    %cst_46 = arith.constant dense<0.000000e+00> : vector<8x8xf32>
    %135 = tpu.matmul %134, %123, %cst_46 {dimension_numbers = #tpu.dot_dimension_numbers<[1], [0], [0], [1], [0, 0, 1, 1], [], []>} : vector<8x8xf32>, vector<8x8xf32>, vector<8x8xf32> -> vector<8x8xf32>
    %136 = vector.extract_strided_slice %6 {offsets = [16, 0], sizes = [8, 32], strides = [1, 1]} : vector<32x32xf32> to vector<8x32xf32>
    %cst_47 = arith.constant dense<0.000000e+00> : vector<8x32xf32>
    %137 = tpu.matmul %135, %136, %cst_47 {dimension_numbers = #tpu.dot_dimension_numbers<[1], [0], [0], [1], [0, 0, 1, 1], [], []>} : vector<8x8xf32>, vector<8x32xf32>, vector<8x32xf32> -> vector<8x32xf32>
    %138 = arith.addf %120, %137 : vector<8x32xf32>
    %139 = vector.extract_strided_slice %5 {offsets = [8, 24], sizes = [8, 8], strides = [1, 1]} : vector<16x96xf32> to vector<8x8xf32>
    %140 = vector.extract_strided_slice %5 {offsets = [8, 56], sizes = [8, 8], strides = [1, 1]} : vector<16x96xf32> to vector<8x8xf32>
    %141 = vector.extract_strided_slice %5 {offsets = [8, 88], sizes = [8, 8], strides = [1, 1]} : vector<16x96xf32> to vector<8x8xf32>
    %cst_48 = arith.constant dense<0.000000e+00> : vector<8x8xf32>
    %142 = tpu.matmul %139, %140, %cst_48 {dimension_numbers = #tpu.dot_dimension_numbers<[1], [1], [0], [0], [0, 0, 1, 0], [], []>} : vector<8x8xf32>, vector<8x8xf32>, vector<8x8xf32> -> vector<8x8xf32>
    %cst_49 = arith.constant dense<0xFF800000> : vector<8xf32>
    %143 = vector.multi_reduction <maximumf>, %142, %cst_49 [1] : vector<8x8xf32> to vector<8xf32>
    %144 = vector.shape_cast %143 : vector<8xf32> to vector<8x1xf32>
    %145 = vector.broadcast %144 : vector<8x1xf32> to vector<8x8xf32>
    %146 = arith.subf %142, %145 : vector<8x8xf32>
    %147 = math.exp %146 : vector<8x8xf32>
    %cst_50 = arith.constant dense<0.000000e+00> : vector<8xf32>
    %148 = vector.multi_reduction <add>, %147, %cst_50 [1] : vector<8x8xf32> to vector<8xf32>
    %149 = vector.shape_cast %148 : vector<8xf32> to vector<8x1xf32>
    %150 = tpu.reciprocal %149 : vector<8x1xf32> -> vector<8x1xf32>
    %151 = vector.broadcast %150 : vector<8x1xf32> to vector<8x8xf32>
    %152 = arith.mulf %147, %151 : vector<8x8xf32>
    %cst_51 = arith.constant dense<0.000000e+00> : vector<8x8xf32>
    %153 = tpu.matmul %152, %141, %cst_51 {dimension_numbers = #tpu.dot_dimension_numbers<[1], [0], [0], [1], [0, 0, 1, 1], [], []>} : vector<8x8xf32>, vector<8x8xf32>, vector<8x8xf32> -> vector<8x8xf32>
    %154 = vector.extract_strided_slice %6 {offsets = [24, 0], sizes = [8, 32], strides = [1, 1]} : vector<32x32xf32> to vector<8x32xf32>
    %cst_52 = arith.constant dense<0.000000e+00> : vector<8x32xf32>
    %155 = tpu.matmul %153, %154, %cst_52 {dimension_numbers = #tpu.dot_dimension_numbers<[1], [0], [0], [1], [0, 0, 1, 1], [], []>} : vector<8x8xf32>, vector<8x32xf32>, vector<8x32xf32> -> vector<8x32xf32>
    %156 = arith.addf %138, %155 : vector<8x32xf32>
    %157 = vector.broadcast %7 : vector<1x32xf32> to vector<8x32xf32>
    %158 = arith.addf %156, %157 : vector<8x32xf32>
    %c8 = arith.constant 8 : index
    %c0_53 = arith.constant 0 : index
    %159 = vector.load %arg6[%c8, %c0_53] : memref<16x32xf32, #tpu.memory_space<vmem>>, vector<8x32xf32>
    tpu.vector_store %arg6[%c8, %c0_53], %158 {strides = array<i32>} : memref<16x32xf32, #tpu.memory_space<vmem>>, vector<8x32xf32>,
    return
  }
  func.func @transform_0(%arg0: i32) -> (i32, i32) {
    %c0_i32 = arith.constant 0 : i32
    %c0_i32_0 = arith.constant 0 : i32
    return %arg0, %c0_i32 : i32, i32
  }
  func.func @transform_1(%arg0: i32) -> (i32, i32) {
    %c0_i32 = arith.constant 0 : i32
    %c0_i32_0 = arith.constant 0 : i32
    %c0_i32_1 = arith.constant 0 : i32
    return %c0_i32, %c0_i32_0 : i32, i32
  }
  func.func @transform_2(%arg0: i32) -> (i32, i32) {
    %c0_i32 = arith.constant 0 : i32
    %c0_i32_0 = arith.constant 0 : i32
    %c0_i32_1 = arith.constant 0 : i32
    return %c0_i32, %c0_i32_0 : i32, i32
  }
  func.func @transform_3(%arg0: i32) -> (i32, i32) {
    %c0_i32 = arith.constant 0 : i32
    %c0_i32_0 = arith.constant 0 : i32
    %c0_i32_1 = arith.constant 0 : i32
    return %c0_i32, %c0_i32_0 : i32, i32
  }
  func.func @transform_4(%arg0: i32) -> (i32, i32) {
    %c0_i32 = arith.constant 0 : i32
    %c0_i32_0 = arith.constant 0 : i32
    %c0_i32_1 = arith.constant 0 : i32
    return %c0_i32, %c0_i32_0 : i32, i32
  }
  func.func @transform_5(%arg0: i32) -> (i32, i32) {
    %c0_i32 = arith.constant 0 : i32
    %c0_i32_0 = arith.constant 0 : i32
    return %arg0, %c0_i32 : i32, i32
  }
}

</mosaic_0001>

<llo_original>
// kernel: tpu_custom_call.1
$region0: #{tpu_custom_call.1}
  #allocation0 [shape = 'u32[]', space=smem, size = 0x4, offset = 0x4, fixed_abs, tag = 'smem constant byte address 0x4 - core index']
  #allocation1 [shape = 'u32[144,128]{1,0:T(1,128)}', space=vmem, size = 0x12000, scoped, tag = 'internal scratch']
  %s0 = inlined_call_operand.hbm [shape: f32[16,32], index: 0, kind: input, shape index: {}]
  %s1 = inlined_call_operand.hbm [shape: f32[32,96], index: 1, kind: input, shape index: {}]
  %s2 = inlined_call_operand.vmem [shape: f32[1,96], index: 2, kind: input, shape index: {}]
  %s3 = inlined_call_operand.hbm [shape: f32[32,32], index: 3, kind: input, shape index: {}]
  %s4 = inlined_call_operand.vmem [shape: f32[1,32], index: 4, kind: input, shape index: {}]
  %s5 = inlined_call_operand.hbm [shape: f32[16,32], index: 5, kind: output, shape index: {}]
  %s6 = sld [smem:[#allocation0]]
  $region42: #{tpu_custom_call.1} parent=0
    _
  %s8 = ssub.s32 1, %s6
  %s9 = scalar_select 0, %s8, %s6
  $region1: #{tpu_custom_call.1} parent=0
    #allocation2 [shape = 'u8[8192]{0}', space=vmem, size = 0x2000, scoped, tag = 'input window, operand 0, single buffered']
    #allocation3 [shape = 's32[1]{0}', space=sflag, size = 0x4, scoped, tag = 'scoped memory for tpu_custom_call.1']
    #allocation4 [shape = 's32[1]{0}', space=sflag, size = 0x4, scoped, tag = 'scoped memory for tpu_custom_call.1']
    #allocation5 [shape = 'u8[16384]{0}', space=vmem, size = 0x4000, scoped, tag = 'input window, operand 1, single buffered']
    #allocation6 [shape = 's32[1]{0}', space=sflag, size = 0x4, scoped, tag = 'scoped memory for tpu_custom_call.1']
    #allocation7 [shape = 'u8[16384]{0}', space=vmem, size = 0x4000, scoped, tag = 'input window, operand 3, single buffered']
    #allocation8 [shape = 'u8[8192]{0}', space=vmem, size = 0x2000, scoped, tag = 'output window, operand 0, single buffered']
    %10 = vsyncpa [#allocation3], 0
    %11 = vsyncpa [#allocation6], 0
    %12 = vsyncpa [#allocation4], 0
    // Predicated region
    $region2: #{tpu_custom_call.1} parent=1 // pred_check
      _
    $region3: #{tpu_custom_call.1} parent=1 // pred_check_branch
      %14 = sbr.rel (0) target = $region5
    $region4: #{tpu_custom_call.1} parent=1 // pred_region
      %s16 = ssub.s32 256, 256
      %17 = vsyncadd [#allocation3], %s16
      %s18 = sshll.u32 [#allocation2], 4
      %s19 = int_to_ptr.vmem [resolvable:$true] %s18
      %24 = dma.hbm_to_vmem [thread:$0]  %s0, 256, %s19, [#allocation3], 128, 128, 8
    $region5: #{tpu_custom_call.1} parent=1 // pred_fallthru
      _
    // Predicated region
    $region6: #{tpu_custom_call.1} parent=1 // pred_check
      _
    $region7: #{tpu_custom_call.1} parent=1 // pred_check_branch
      %26 = sbr.rel (0) target = $region9
    $region8: #{tpu_custom_call.1} parent=1 // pred_region
      %s28 = ssub.s32 512, 512
      %29 = vsyncadd [#allocation6], %s28
      %s30 = sshll.u32 [#allocation5], 4
      %s31 = int_to_ptr.vmem [resolvable:$true] %s30
      %36 = dma.hbm_to_vmem [thread:$0]  %s1, 512, %s31, [#allocation6], 128, 128, 8
    $region9: #{tpu_custom_call.1} parent=1 // pred_fallthru
      _
    // Predicated region
    $region10: #{tpu_custom_call.1} parent=1 // pred_check
      _
    $region11: #{tpu_custom_call.1} parent=1 // pred_check_branch
      %38 = sbr.rel (0) target = $region13
    $region12: #{tpu_custom_call.1} parent=1 // pred_region
      _
    $region13: #{tpu_custom_call.1} parent=1 // pred_fallthru
      _
    // Predicated region
    $region14: #{tpu_custom_call.1} parent=1 // pred_check
      _
    $region15: #{tpu_custom_call.1} parent=1 // pred_check_branch
      %40 = sbr.rel (0) target = $region17
    $region16: #{tpu_custom_call.1} parent=1 // pred_region
      %s42 = ssub.s32 512, 512
      %43 = vsyncadd [#allocation6], %s42
      %s44 = sshll.u32 [#allocation7], 4
      %s45 = int_to_ptr.vmem [resolvable:$true] %s44
      %50 = dma.hbm_to_vmem [thread:$0]  %s3, 512, %s45, [#allocation6], 128, 128, 8
    $region17: #{tpu_custom_call.1} parent=1 // pred_fallthru
      _
    // Predicated region
    $region18: #{tpu_custom_call.1} parent=1 // pred_check
      _
    $region19: #{tpu_custom_call.1} parent=1 // pred_check_branch
      %52 = sbr.rel (0) target = $region21
    $region20: #{tpu_custom_call.1} parent=1 // pred_region
      _
    $region21: #{tpu_custom_call.1} parent=1 // pred_fallthru
      _
    // Predicated region
    $region22: #{tpu_custom_call.1} parent=1 // pred_check
      _
    $region23: #{tpu_custom_call.1} parent=1 // pred_check_branch
      %54 = sbr.rel (0) target = $region25
    $region24: #{tpu_custom_call.1} parent=1 // pred_region
      %55 = dma.done [#allocation3], 256
    $region25: #{tpu_custom_call.1} parent=1 // pred_fallthru
      _
    // Predicated region
    $region26: #{tpu_custom_call.1} parent=1 // pred_check
      _
    $region27: #{tpu_custom_call.1} parent=1 // pred_check_branch
      %57 = sbr.rel (0) target = $region29
    $region28: #{tpu_custom_call.1} parent=1 // pred_region
      %58 = dma.done [#allocation6], 512
    $region29: #{tpu_custom_call.1} parent=1 // pred_fallthru
      _
    // Predicated region
    $region30: #{tpu_custom_call.1} parent=1 // pred_check
      _
    $region31: #{tpu_custom_call.1} parent=1 // pred_check_branch
      %60 = sbr.rel (0) target = $region33
    $region32: #{tpu_custom_call.1} parent=1 // pred_region
      %61 = dma.done [#allocation6], 512
    $region33: #{tpu_custom_call.1} parent=1 // pred_fallthru
      _
    %v62 = vld [vmem:[#allocation2] sm:$0xff]
    %v63 = vld [vmem:[#allocation2 + $0x8] sm:$0xff]
    %v64 = vld [vmem:[#allocation5] sm:$0xff]
    %v65 = vld [vmem:[#allocation5 + $0x8] sm:$0xff]
    %v66 = vld [vmem:[#allocation5 + $0x10] sm:$0xff]
    %v67 = vld [vmem:[#allocation5 + $0x18] sm:$0xff]
    %v68 = vld [vmem:[%s2] sm:$0x1]
    %v70 = vlaneseq
    %v71 = vshrl.u32 %v70, 7
    %v72 = vsub.s32 0, %v71
    %v73 = vrot.slane %v68, %v72
    %vm75 = vcmask 261120
    %v77 = vsel %vm75, %v62, 0
    %v80 = vsel %vm75, %v63, 0
    %82 = vmatprep.subr.mxu0 0.0
    %83 = vmatpush1.msra.mxu0 %v64
    %84 = vmatprep.subr.mxu0 0.0
    %85 = vmatpush1.msra.mxu0 %v65
    %86 = vmatprep.subr.mxu0 0.0
    %87 = vmatpush1.msra.mxu0 %v66
    %88 = vmatprep.subr.mxu0 0.0
    %89 = vmatpush1.msra.mxu0 %v67
    %90 = vmatprep.subr.mxu0 0.0
    %91 = vmatpush1.msra.mxu0 0.0
    %92 = vmatprep.subr.mxu0 0.0
    %93 = vmatpush1.msra.mxu0 0.0
    %94 = vmatprep.subr.mxu0 0.0
    %95 = vmatpush1.msra.mxu0 0.0
    %96 = vmatprep.subr.mxu0 0.0
    %97 = vmatpush1.msra.mxu0 0.0
    %98 = vmatprep.subr.mxu0 0.0
    %99 = vmatpush1.msra.mxu0 0.0
    %100 = vmatprep.subr.mxu0 0.0
    %101 = vmatpush1.msra.mxu0 0.0
    %102 = vmatprep.subr.mxu0 0.0
    %103 = vmatpush1.msra.mxu0 0.0
    %104 = vmatprep.subr.mxu0 0.0
    %105 = vmatpush1.msra.mxu0 0.0
    %106 = vmatprep.subr.mxu0 0.0
    %107 = vmatpush1.msra.mxu0 0.0
    %108 = vmatprep.subr.mxu0 0.0
    %109 = vmatpush1.msra.mxu0 0.0
    %110 = vmatprep.subr.mxu0 0.0
    %111 = vmatpush1.msra.mxu0 0.0
    %112 = vmatprep.subr.mxu0 0.0
    %113 = vmatpush1.msra.mxu0 0.0
    %114 = vmatprep.subr.mxu0 0.0
    %115 = vmatpush1.msra.mxu0 0.0
    %116 = vmatprep.subr.mxu0 0.0
    %117 = vmatpush1.msra.mxu0 0.0
    %118 = vmatprep.subr.mxu0 0.0
    %119 = vmatpush1.msra.mxu0 0.0
    %120 = vmatprep.subr.mxu0 0.0
    %121 = vmatpush1.msra.mxu0 0.0
    %122 = vmatprep.subr.mxu0 0.0
    %123 = vmatpush1.msra.mxu0 0.0
    %124 = vmatprep.subr.mxu0 0.0
    %125 = vmatpush1.msra.mxu0 0.0
    %126 = vmatprep.subr.mxu0 0.0
    %127 = vmatpush1.msra.mxu0 0.0
    %128 = vmatprep.subr.mxu0 0.0
    %129 = vmatpush1.msra.mxu0 0.0
    %130 = vmatprep.subr.mxu0 0.0
    %131 = vmatpush1.msra.mxu0 0.0
    %132 = vmatprep.subr.mxu0 0.0
    %133 = vmatpush1.msra.mxu0 0.0
    %134 = vmatprep.subr.mxu0 0.0
    %135 = vmatpush1.msra.mxu0 0.0
    %136 = vmatprep.subr.mxu0 0.0
    %137 = vmatpush1.msra.mxu0 0.0
    %138 = vmatprep.subr.mxu0 0.0
    %139 = vmatpush1.msra.mxu0 0.0
    %140 = vmatprep.subr.mxu0 0.0
    %141 = vmatpush1.msra.mxu0 0.0
    %142 = vmatprep.subr.mxu0 0.0
    %143 = vmatpush1.msra.mxu0 0.0
    %144 = vmatprep.subr.mxu0 0.0
    %145 = vmatpush1.msra.mxu0 0.0
    %146 = vmatprep.mubr.f32.mxu0 0.0
    %147 = vmatmul.mubr.f32.gmra.mrb[0].mxu0 %v77
    %v148 = vpop.f32.mrb[0].mxu0
    %v149 = vadd.f32 %v73, %v148
    %v150 = vpop.f32.mrb[0].mxu0
    %151 = vmatprep.mubr.f32.mxu0 0.0
    %152 = vmatmul.mubr.f32.gmra.mrb[0].mxu0 %v80
    %v153 = vpop.f32.mrb[0].mxu0
    %v154 = vadd.f32 %v73, %v153
    %v155 = vpop.f32.mrb[0].mxu0
    %156 = vdwg.mxu0
    %v157 = vld [vmem:[#allocation7] sm:$0xff]
    %v158 = vld [vmem:[#allocation7 + $0x8] sm:$0xff]
    %v159 = vld [vmem:[#allocation7 + $0x10] sm:$0xff]
    %v160 = vld [vmem:[#allocation7 + $0x18] sm:$0xff]
    %v161 = vld [vmem:[%s4] sm:$0x1]
    %163 = vrot.lane.b32.xlu0 %v149, 96
    %v164 = vpop.permute.xlu0 %163
    %vm165 = vcmask 64512
    %v166 = vsel %vm165, %v149, 0
    %v168 = vsel %vm165, %v164, 0
    %170 = vmatprep.subr.mxu0 0.0
    %171 = vmatpush1.xpose.msra.mxu0 %v168
    %172 = vmatprep.subr.mxu0 0.0
    %173 = vmatpush1.xpose.msra.mxu0 0.0
    %174 = vmatprep.subr.mxu0 0.0
    %175 = vmatpush1.xpose.msra.mxu0 0.0
    %176 = vmatprep.subr.mxu0 0.0
    %177 = vmatpush1.xpose.msra.mxu0 0.0
    %178 = vmatprep.subr.mxu0 0.0
    %179 = vmatpush1.xpose.msra.mxu0 0.0
    %180 = vmatprep.subr.mxu0 0.0
    %181 = vmatpush1.xpose.msra.mxu0 0.0
    %182 = vmatprep.subr.mxu0 0.0
    %183 = vmatpush1.xpose.msra.mxu0 0.0
    %184 = vmatprep.subr.mxu0 0.0
    %185 = vmatpush1.xpose.msra.mxu0 0.0
    %186 = vmatprep.subr.mxu0 0.0
    %187 = vmatpush1.xpose.msra.mxu0 0.0
    %188 = vmatprep.subr.mxu0 0.0
    %189 = vmatpush1.xpose.msra.mxu0 0.0
    %190 = vmatprep.subr.mxu0 0.0
    %191 = vmatpush1.xpose.msra.mxu0 0.0
    %192 = vmatprep.subr.mxu0 0.0
    %193 = vmatpush1.xpose.msra.mxu0 0.0
    %194 = vmatprep.subr.mxu0 0.0
    %195 = vmatpush1.xpose.msra.mxu0 0.0
    %196 = vmatprep.subr.mxu0 0.0
    %197 = vmatpush1.xpose.msra.mxu0 0.0
    %198 = vmatprep.subr.mxu0 0.0
    %199 = vmatpush1.xpose.msra.mxu0 0.0
    %200 = vmatprep.subr.mxu0 0.0
    %201 = vmatpush1.xpose.msra.mxu0 0.0
    %202 = vmatprep.subr.mxu0 0.0
    %203 = vmatpush1.xpose.msra.mxu0 0.0
    %204 = vmatprep.subr.mxu0 0.0
    %205 = vmatpush1.xpose.msra.mxu0 0.0
    %206 = vmatprep.subr.mxu0 0.0
    %207 = vmatpush1.xpose.msra.mxu0 0.0
    %208 = vmatprep.subr.mxu0 0.0
    %209 = vmatpush1.xpose.msra.mxu0 0.0
    %210 = vmatprep.subr.mxu0 0.0
    %211 = vmatpush1.xpose.msra.mxu0 0.0
    %212 = vmatprep.subr.mxu0 0.0
    %213 = vmatpush1.xpose.msra.mxu0 0.0
    %214 = vmatprep.subr.mxu0 0.0
    %215 = vmatpush1.xpose.msra.mxu0 0.0
    %216 = vmatprep.subr.mxu0 0.0
    %217 = vmatpush1.xpose.msra.mxu0 0.0
    %218 = vmatprep.subr.mxu0 0.0
    %219 = vmatpush1.xpose.msra.mxu0 0.0
    %220 = vmatprep.subr.mxu0 0.0
    %221 = vmatpush1.xpose.msra.mxu0 0.0
    %222 = vmatprep.subr.mxu0 0.0
    %223 = vmatpush1.xpose.msra.mxu0 0.0
    %224 = vmatprep.subr.mxu0 0.0
    %225 = vmatpush1.xpose.msra.mxu0 0.0
    %226 = vmatprep.subr.mxu0 0.0
    %227 = vmatpush1.xpose.msra.mxu0 0.0
    %228 = vmatprep.subr.mxu0 0.0
    %229 = vmatpush1.xpose.msra.mxu0 0.0
    %230 = vmatprep.subr.mxu0 0.0
    %231 = vmatpush1.xpose.msra.mxu0 0.0
    %232 = vmatprep.subr.mxu0 0.0
    %233 = vmatpush1.xpose.msra.mxu0 0.0
    %234 = vmatprep.mubr.f32.mxu0 0.0
    %235 = vmatmul.mubr.f32.gmra.mrb[0].mxu0 %v166
    %v236 = vpop.f32.mrb[0].mxu0
    %v237 = vadd.f32 0.0, %v236
    %v238 = vpop.f32.mrb[0].mxu0
    %239 = vdwg.mxu0
    %v240 = vsel %vm165, %v237, -inf
    %241 = vmax.xlane.f32.xlu0 %v240
    %v242 = vpop.xlane.xlu0 %241
    %v243 = vsub.f32 %v237, %v242
    %v244 = vmul.f32 %v243, 1.442695
    %v245 = vpow.pop %v244
    %v246 = vsel %vm165, %v245, 0.0
    %247 = vadd.xlane.f32.xlu0 %v246
    %v248 = vpop.xlane.xlu0 %247
    %v249 = vrcp.pop %v248
    %v250 = vmul.f32 %v245, %v249
    %251 = vrot.lane.b32.xlu0 %v149, 64
    %v252 = vpop.permute.xlu0 %251
    %v255 = vsel %vm165, %v250, 0
    %257 = vmatprep.subr.mxu0 0.0
    %258 = vmatpush1.msra.mxu0 %v252
    %259 = vmatprep.subr.mxu0 0.0
    %260 = vmatpush1.msra.mxu0 0.0
    %261 = vmatprep.subr.mxu0 0.0
    %262 = vmatpush1.msra.mxu0 0.0
    %263 = vmatprep.subr.mxu0 0.0
    %264 = vmatpush1.msra.mxu0 0.0
    %265 = vmatprep.subr.mxu0 0.0
    %266 = vmatpush1.msra.mxu0 0.0
    %267 = vmatprep.subr.mxu0 0.0
    %268 = vmatpush1.msra.mxu0 0.0
    %269 = vmatprep.subr.mxu0 0.0
    %270 = vmatpush1.msra.mxu0 0.0
    %271 = vmatprep.subr.mxu0 0.0
    %272 = vmatpush1.msra.mxu0 0.0
    %273 = vmatprep.subr.mxu0 0.0
    %274 = vmatpush1.msra.mxu0 0.0
    %275 = vmatprep.subr.mxu0 0.0
    %276 = vmatpush1.msra.mxu0 0.0
    %277 = vmatprep.subr.mxu0 0.0
    %278 = vmatpush1.msra.mxu0 0.0
    %279 = vmatprep.subr.mxu0 0.0
    %280 = vmatpush1.msra.mxu0 0.0
    %281 = vmatprep.subr.mxu0 0.0
    %282 = vmatpush1.msra.mxu0 0.0
    %283 = vmatprep.subr.mxu0 0.0
    %284 = vmatpush1.msra.mxu0 0.0
    %285 = vmatprep.subr.mxu0 0.0
    %286 = vmatpush1.msra.mxu0 0.0
    %287 = vmatprep.subr.mxu0 0.0
    %288 = vmatpush1.msra.mxu0 0.0
    %289 = vmatprep.subr.mxu0 0.0
    %290 = vmatpush1.msra.mxu0 0.0
    %291 = vmatprep.subr.mxu0 0.0
    %292 = vmatpush1.msra.mxu0 0.0
    %293 = vmatprep.subr.mxu0 0.0
    %294 = vmatpush1.msra.mxu0 0.0
    %295 = vmatprep.subr.mxu0 0.0
    %296 = vmatpush1.msra.mxu0 0.0
    %297 = vmatprep.subr.mxu0 0.0
    %298 = vmatpush1.msra.mxu0 0.0
    %299 = vmatprep.subr.mxu0 0.0
    %300 = vmatpush1.msra.mxu0 0.0
    %301 = vmatprep.subr.mxu0 0.0
    %302 = vmatpush1.msra.mxu0 0.0
    %303 = vmatprep.subr.mxu0 0.0
    %304 = vmatpush1.msra.mxu0 0.0
    %305 = vmatprep.subr.mxu0 0.0
    %306 = vmatpush1.msra.mxu0 0.0
    %307 = vmatprep.subr.mxu0 0.0
    %308 = vmatpush1.msra.mxu0 0.0
    %309 = vmatprep.subr.mxu0 0.0
    %310 = vmatpush1.msra.mxu0 0.0
    %311 = vmatprep.subr.mxu0 0.0
    %312 = vmatpush1.msra.mxu0 0.0
    %313 = vmatprep.subr.mxu0 0.0
    %314 = vmatpush1.msra.mxu0 0.0
    %315 = vmatprep.subr.mxu0 0.0
    %316 = vmatpush1.msra.mxu0 0.0
    %317 = vmatprep.subr.mxu0 0.0
    %318 = vmatpush1.msra.mxu0 0.0
    %319 = vmatprep.subr.mxu0 0.0
    %320 = vmatpush1.msra.mxu0 0.0
    %321 = vmatprep.mubr.f32.mxu0 0.0
    %322 = vmatmul.mubr.f32.gmra.mrb[0].mxu0 %v255
    %v323 = vpop.f32.mrb[0].mxu0
    %v324 = vadd.f32 0.0, %v323
    %v325 = vpop.f32.mrb[0].mxu0
    %326 = vdwg.mxu0
    %327 = vrot.lane.b32.xlu0 %v149, 120
    %v328 = vpop.permute.xlu0 %327
    %329 = vrot.lane.b32.xlu0 %v149, 88
    %v330 = vpop.permute.xlu0 %329
    %v331 = vsel %vm165, %v328, 0
    %v333 = vsel %vm165, %v330, 0
    %335 = vmatprep.subr.mxu0 0.0
    %336 = vmatpush1.xpose.msra.mxu0 %v333
    %337 = vmatprep.subr.mxu0 0.0
    %338 = vmatpush1.xpose.msra.mxu0 0.0
    %339 = vmatprep.subr.mxu0 0.0
    %340 = vmatpush1.xpose.msra.mxu0 0.0
    %341 = vmatprep.subr.mxu0 0.0
    %342 = vmatpush1.xpose.msra.mxu0 0.0
    %343 = vmatprep.subr.mxu0 0.0
    %344 = vmatpush1.xpose.msra.mxu0 0.0
    %345 = vmatprep.subr.mxu0 0.0
    %346 = vmatpush1.xpose.msra.mxu0 0.0
    %347 = vmatprep.subr.mxu0 0.0
    %348 = vmatpush1.xpose.msra.mxu0 0.0
    %349 = vmatprep.subr.mxu0 0.0
    %350 = vmatpush1.xpose.msra.mxu0 0.0
    %351 = vmatprep.subr.mxu0 0.0
    %352 = vmatpush1.xpose.msra.mxu0 0.0
    %353 = vmatprep.subr.mxu0 0.0
    %354 = vmatpush1.xpose.msra.mxu0 0.0
    %355 = vmatprep.subr.mxu0 0.0
    %356 = vmatpush1.xpose.msra.mxu0 0.0
    %357 = vmatprep.subr.mxu0 0.0
    %358 = vmatpush1.xpose.msra.mxu0 0.0
    %359 = vmatprep.subr.mxu0 0.0
    %360 = vmatpush1.xpose.msra.mxu0 0.0
    %361 = vmatprep.subr.mxu0 0.0
    %362 = vmatpush1.xpose.msra.mxu0 0.0
    %363 = vmatprep.subr.mxu0 0.0
    %364 = vmatpush1.xpose.msra.mxu0 0.0
    %365 = vmatprep.subr.mxu0 0.0
    %366 = vmatpush1.xpose.msra.mxu0 0.0
    %367 = vmatprep.subr.mxu0 0.0
    %368 = vmatpush1.xpose.msra.mxu0 0.0
    %369 = vmatprep.subr.mxu0 0.0
    %370 = vmatpush1.xpose.msra.mxu0 0.0
    %371 = vmatprep.subr.mxu0 0.0
    %372 = vmatpush1.xpose.msra.mxu0 0.0
    %373 = vmatprep.subr.mxu0 0.0
    %374 = vmatpush1.xpose.msra.mxu0 0.0
    %375 = vmatprep.subr.mxu0 0.0
    %376 = vmatpush1.xpose.msra.mxu0 0.0
    %377 = vmatprep.subr.mxu0 0.0
    %378 = vmatpush1.xpose.msra.mxu0 0.0
    %379 = vmatprep.subr.mxu0 0.0
    %380 = vmatpush1.xpose.msra.mxu0 0.0
    %381 = vmatprep.subr.mxu0 0.0
    %382 = vmatpush1.xpose.msra.mxu0 0.0
    %383 = vmatprep.subr.mxu0 0.0
    %384 = vmatpush1.xpose.msra.mxu0 0.0
    %385 = vmatprep.subr.mxu0 0.0
    %386 = vmatpush1.xpose.msra.mxu0 0.0
    %387 = vmatprep.subr.mxu0 0.0
    %388 = vmatpush1.xpose.msra.mxu0 0.0
    %389 = vmatprep.subr.mxu0 0.0
    %390 = vmatpush1.xpose.msra.mxu0 0.0
    %391 = vmatprep.subr.mxu0 0.0
    %392 = vmatpush1.xpose.msra.mxu0 0.0
    %393 = vmatprep.subr.mxu0 0.0
    %394 = vmatpush1.xpose.msra.mxu0 0.0
    %395 = vmatprep.subr.mxu0 0.0
    %396 = vmatpush1.xpose.msra.mxu0 0.0
    %397 = vmatprep.subr.mxu0 0.0
    %398 = vmatpush1.xpose.msra.mxu0 0.0
    %399 = vmatprep.mubr.f32.mxu0 0.0
    %400 = vmatmul.mubr.f32.gmra.mrb[0].mxu0 %v331
    %v401 = vpop.f32.mrb[0].mxu0
    %v402 = vadd.f32 0.0, %v401
    %v403 = vpop.f32.mrb[0].mxu0
    %404 = vdwg.mxu0
    %v405 = vsel %vm165, %v402, -inf
    %406 = vmax.xlane.f32.xlu0 %v405
    %v407 = vpop.xlane.xlu0 %406
    %v408 = vsub.f32 %v402, %v407
    %v409 = vmul.f32 %v408, 1.442695
    %v410 = vpow.pop %v409
    %v411 = vsel %vm165, %v410, 0.0
    %412 = vadd.xlane.f32.xlu0 %v411
    %v413 = vpop.xlane.xlu0 %412
    %v414 = vrcp.pop %v413
    %v415 = vmul.f32 %v410, %v414
    %416 = vrot.lane.b32.xlu0 %v149, 56
    %v417 = vpop.permute.xlu0 %416
    %v420 = vsel %vm165, %v415, 0
    %422 = vmatprep.subr.mxu0 0.0
    %423 = vmatpush1.msra.mxu0 %v417
    %424 = vmatprep.subr.mxu0 0.0
    %425 = vmatpush1.msra.mxu0 0.0
    %426 = vmatprep.subr.mxu0 0.0
    %427 = vmatpush1.msra.mxu0 0.0
    %428 = vmatprep.subr.mxu0 0.0
    %429 = vmatpush1.msra.mxu0 0.0
    %430 = vmatprep.subr.mxu0 0.0
    %431 = vmatpush1.msra.mxu0 0.0
    %432 = vmatprep.subr.mxu0 0.0
    %433 = vmatpush1.msra.mxu0 0.0
    %434 = vmatprep.subr.mxu0 0.0
    %435 = vmatpush1.msra.mxu0 0.0
    %436 = vmatprep.subr.mxu0 0.0
    %437 = vmatpush1.msra.mxu0 0.0
    %438 = vmatprep.subr.mxu0 0.0
    %439 = vmatpush1.msra.mxu0 0.0
    %440 = vmatprep.subr.mxu0 0.0
    %441 = vmatpush1.msra.mxu0 0.0
    %442 = vmatprep.subr.mxu0 0.0
    %443 = vmatpush1.msra.mxu0 0.0
    %444 = vmatprep.subr.mxu0 0.0
    %445 = vmatpush1.msra.mxu0 0.0
    %446 = vmatprep.subr.mxu0 0.0
    %447 = vmatpush1.msra.mxu0 0.0
    %448 = vmatprep.subr.mxu0 0.0
    %449 = vmatpush1.msra.mxu0 0.0
    %450 = vmatprep.subr.mxu0 0.0
    %451 = vmatpush1.msra.mxu0 0.0
    %452 = vmatprep.subr.mxu0 0.0
    %453 = vmatpush1.msra.mxu0 0.0
    %454 = vmatprep.subr.mxu0 0.0
    %455 = vmatpush1.msra.mxu0 0.0
    %456 = vmatprep.subr.mxu0 0.0
    %457 = vmatpush1.msra.mxu0 0.0
    %458 = vmatprep.subr.mxu0 0.0
    %459 = vmatpush1.msra.mxu0 0.0
    %460 = vmatprep.subr.mxu0 0.0
    %461 = vmatpush1.msra.mxu0 0.0
    %462 = vmatprep.subr.mxu0 0.0
    %463 = vmatpush1.msra.mxu0 0.0
    %464 = vmatprep.subr.mxu0 0.0
    %465 = vmatpush1.msra.mxu0 0.0
    %466 = vmatprep.subr.mxu0 0.0
    %467 = vmatpush1.msra.mxu0 0.0
    %468 = vmatprep.subr.mxu0 0.0
    %469 = vmatpush1.msra.mxu0 0.0
    %470 = vmatprep.subr.mxu0 0.0
    %471 = vmatpush1.msra.mxu0 0.0
    %472 = vmatprep.subr.mxu0 0.0
    %473 = vmatpush1.msra.mxu0 0.0
    %474 = vmatprep.subr.mxu0 0.0
    %475 = vmatpush1.msra.mxu0 0.0
    %476 = vmatprep.subr.mxu0 0.0
    %477 = vmatpush1.msra.mxu0 0.0
    %478 = vmatprep.subr.mxu0 0.0
    %479 = vmatpush1.msra.mxu0 0.0
    %480 = vmatprep.subr.mxu0 0.0
    %481 = vmatpush1.msra.mxu0 0.0
    %482 = vmatprep.subr.mxu0 0.0
    %483 = vmatpush1.msra.mxu0 0.0
    %484 = vmatprep.subr.mxu0 0.0
    %485 = vmatpush1.msra.mxu0 0.0
    %486 = vmatprep.mubr.f32.mxu0 0.0
    %487 = vmatmul.mubr.f32.gmra.mrb[0].mxu0 %v420
    %v488 = vpop.f32.mrb[0].mxu0
    %v489 = vadd.f32 0.0, %v488
    %v490 = vpop.f32.mrb[0].mxu0
    %491 = vdwg.mxu0
    %v493 = vsel %vm165, %v489, 0
    %495 = vmatprep.subr.mxu0 0.0
    %496 = vmatpush1.msra.mxu0 %v158
    %497 = vmatprep.subr.mxu0 0.0
    %498 = vmatpush1.msra.mxu0 0.0
    %499 = vmatprep.subr.mxu0 0.0
    %500 = vmatpush1.msra.mxu0 0.0
    %501 = vmatprep.subr.mxu0 0.0
    %502 = vmatpush1.msra.mxu0 0.0
    %503 = vmatprep.subr.mxu0 0.0
    %504 = vmatpush1.msra.mxu0 0.0
    %505 = vmatprep.subr.mxu0 0.0
    %506 = vmatpush1.msra.mxu0 0.0
    %507 = vmatprep.subr.mxu0 0.0
    %508 = vmatpush1.msra.mxu0 0.0
    %509 = vmatprep.subr.mxu0 0.0
    %510 = vmatpush1.msra.mxu0 0.0
    %511 = vmatprep.subr.mxu0 0.0
    %512 = vmatpush1.msra.mxu0 0.0
    %513 = vmatprep.subr.mxu0 0.0
    %514 = vmatpush1.msra.mxu0 0.0
    %515 = vmatprep.subr.mxu0 0.0
    %516 = vmatpush1.msra.mxu0 0.0
    %517 = vmatprep.subr.mxu0 0.0
    %518 = vmatpush1.msra.mxu0 0.0
    %519 = vmatprep.subr.mxu0 0.0
    %520 = vmatpush1.msra.mxu0 0.0
    %521 = vmatprep.subr.mxu0 0.0
    %522 = vmatpush1.msra.mxu0 0.0
    %523 = vmatprep.subr.mxu0 0.0
    %524 = vmatpush1.msra.mxu0 0.0
    %525 = vmatprep.subr.mxu0 0.0
    %526 = vmatpush1.msra.mxu0 0.0
    %527 = vmatprep.subr.mxu0 0.0
    %528 = vmatpush1.msra.mxu0 0.0
    %529 = vmatprep.subr.mxu0 0.0
    %530 = vmatpush1.msra.mxu0 0.0
    %531 = vmatprep.subr.mxu0 0.0
    %532 = vmatpush1.msra.mxu0 0.0
    %533 = vmatprep.subr.mxu0 0.0
    %534 = vmatpush1.msra.mxu0 0.0
    %535 = vmatprep.subr.mxu0 0.0
    %536 = vmatpush1.msra.mxu0 0.0
    %537 = vmatprep.subr.mxu0 0.0
    %538 = vmatpush1.msra.mxu0 0.0
    %539 = vmatprep.subr.mxu0 0.0
    %540 = vmatpush1.msra.mxu0 0.0
    %541 = vmatprep.subr.mxu0 0.0
    %542 = vmatpush1.msra.mxu0 0.0
    %543 = vmatprep.subr.mxu0 0.0
    %544 = vmatpush1.msra.mxu0 0.0
    %545 = vmatprep.subr.mxu0 0.0
    %546 = vmatpush1.msra.mxu0 0.0
    %547 = vmatprep.subr.mxu0 0.0
    %548 = vmatpush1.msra.mxu0 0.0
    %549 = vmatprep.subr.mxu0 0.0
    %550 = vmatpush1.msra.mxu0 0.0
    %551 = vmatprep.subr.mxu0 0.0
    %552 = vmatpush1.msra.mxu0 0.0
    %553 = vmatprep.subr.mxu0 0.0
    %554 = vmatpush1.msra.mxu0 0.0
    %555 = vmatprep.subr.mxu0 0.0
    %556 = vmatpush1.msra.mxu0 0.0
    %557 = vmatprep.subr.mxu0 0.0
    %558 = vmatpush1.msra.mxu0 0.0
    %559 = vmatprep.mubr.f32.mxu0 0.0
    %560 = vmatmul.mubr.f32.gmra.mrb[0].mxu0 %v493
    %v561 = vpop.f32.mrb[0].mxu0
    %v562 = vadd.f32 0.0, %v561
    %v563 = vpop.f32.mrb[0].mxu0
    %564 = vdwg.mxu0
    %v566 = vsel %vm165, %v324, 0
    %568 = vmatprep.subr.mxu0 0.0
    %569 = vmatpush1.msra.mxu0 %v157
    %570 = vmatprep.subr.mxu0 0.0
    %571 = vmatpush1.msra.mxu0 0.0
    %572 = vmatprep.subr.mxu0 0.0
    %573 = vmatpush1.msra.mxu0 0.0
    %574 = vmatprep.subr.mxu0 0.0
    %575 = vmatpush1.msra.mxu0 0.0
    %576 = vmatprep.subr.mxu0 0.0
    %577 = vmatpush1.msra.mxu0 0.0
    %578 = vmatprep.subr.mxu0 0.0
    %579 = vmatpush1.msra.mxu0 0.0
    %580 = vmatprep.subr.mxu0 0.0
    %581 = vmatpush1.msra.mxu0 0.0
    %582 = vmatprep.subr.mxu0 0.0
    %583 = vmatpush1.msra.mxu0 0.0
    %584 = vmatprep.subr.mxu0 0.0
    %585 = vmatpush1.msra.mxu0 0.0
    %586 = vmatprep.subr.mxu0 0.0
    %587 = vmatpush1.msra.mxu0 0.0
    %588 = vmatprep.subr.mxu0 0.0
    %589 = vmatpush1.msra.mxu0 0.0
    %590 = vmatprep.subr.mxu0 0.0
    %591 = vmatpush1.msra.mxu0 0.0
    %592 = vmatprep.subr.mxu0 0.0
    %593 = vmatpush1.msra.mxu0 0.0
    %594 = vmatprep.subr.mxu0 0.0
    %595 = vmatpush1.msra.mxu0 0.0
    %596 = vmatprep.subr.mxu0 0.0
    %597 = vmatpush1.msra.mxu0 0.0
    %598 = vmatprep.subr.mxu0 0.0
    %599 = vmatpush1.msra.mxu0 0.0
    %600 = vmatprep.subr.mxu0 0.0
    %601 = vmatpush1.msra.mxu0 0.0
    %602 = vmatprep.subr.mxu0 0.0
    %603 = vmatpush1.msra.mxu0 0.0
    %604 = vmatprep.subr.mxu0 0.0
    %605 = vmatpush1.msra.mxu0 0.0
    %606 = vmatprep.subr.mxu0 0.0
    %607 = vmatpush1.msra.mxu0 0.0
    %608 = vmatprep.subr.mxu0 0.0
    %609 = vmatpush1.msra.mxu0 0.0
    %610 = vmatprep.subr.mxu0 0.0
    %611 = vmatpush1.msra.mxu0 0.0
    %612 = vmatprep.subr.mxu0 0.0
    %613 = vmatpush1.msra.mxu0 0.0
    %614 = vmatprep.subr.mxu0 0.0
    %615 = vmatpush1.msra.mxu0 0.0
    %616 = vmatprep.subr.mxu0 0.0
    %617 = vmatpush1.msra.mxu0 0.0
    %618 = vmatprep.subr.mxu0 0.0
    %619 = vmatpush1.msra.mxu0 0.0
    %620 = vmatprep.subr.mxu0 0.0
    %621 = vmatpush1.msra.mxu0 0.0
    %622 = vmatprep.subr.mxu0 0.0
    %623 = vmatpush1.msra.mxu0 0.0
    %624 = vmatprep.subr.mxu0 0.0
    %625 = vmatpush1.msra.mxu0 0.0
    %626 = vmatprep.subr.mxu0 0.0
    %627 = vmatpush1.msra.mxu0 0.0
    %628 = vmatprep.subr.mxu0 0.0
    %629 = vmatpush1.msra.mxu0 0.0
    %630 = vmatprep.subr.mxu0 0.0
    %631 = vmatpush1.msra.mxu0 0.0
    %632 = vmatprep.mubr.f32.mxu0 0.0
    %633 = vmatmul.mubr.f32.gmra.mrb[0].mxu0 %v566
    %v634 = vpop.f32.mrb[0].mxu0
    %v635 = vadd.f32 %v562, %v634
    %v636 = vpop.f32.mrb[0].mxu0
    %637 = vdwg.mxu0
    %638 = vrot.lane.b32.xlu0 %v149, 112
    %v639 = vpop.permute.xlu0 %638
    %640 = vrot.lane.b32.xlu0 %v149, 80
    %v641 = vpop.permute.xlu0 %640
    %v642 = vsel %vm165, %v639, 0
    %v644 = vsel %vm165, %v641, 0
    %646 = vmatprep.subr.mxu0 0.0
    %647 = vmatpush1.xpose.msra.mxu0 %v644
    %648 = vmatprep.subr.mxu0 0.0
    %649 = vmatpush1.xpose.msra.mxu0 0.0
    %650 = vmatprep.subr.mxu0 0.0
    %651 = vmatpush1.xpose.msra.mxu0 0.0
    %652 = vmatprep.subr.mxu0 0.0
    %653 = vmatpush1.xpose.msra.mxu0 0.0
    %654 = vmatprep.subr.mxu0 0.0
    %655 = vmatpush1.xpose.msra.mxu0 0.0
    %656 = vmatprep.subr.mxu0 0.0
    %657 = vmatpush1.xpose.msra.mxu0 0.0
    %658 = vmatprep.subr.mxu0 0.0
    %659 = vmatpush1.xpose.msra.mxu0 0.0
    %660 = vmatprep.subr.mxu0 0.0
    %661 = vmatpush1.xpose.msra.mxu0 0.0
    %662 = vmatprep.subr.mxu0 0.0
    %663 = vmatpush1.xpose.msra.mxu0 0.0
    %664 = vmatprep.subr.mxu0 0.0
    %665 = vmatpush1.xpose.msra.mxu0 0.0
    %666 = vmatprep.subr.mxu0 0.0
    %667 = vmatpush1.xpose.msra.mxu0 0.0
    %668 = vmatprep.subr.mxu0 0.0
    %669 = vmatpush1.xpose.msra.mxu0 0.0
    %670 = vmatprep.subr.mxu0 0.0
    %671 = vmatpush1.xpose.msra.mxu0 0.0
    %672 = vmatprep.subr.mxu0 0.0
    %673 = vmatpush1.xpose.msra.mxu0 0.0
    %674 = vmatprep.subr.mxu0 0.0
    %675 = vmatpush1.xpose.msra.mxu0 0.0
    %676 = vmatprep.subr.mxu0 0.0
    %677 = vmatpush1.xpose.msra.mxu0 0.0
    %678 = vmatprep.subr.mxu0 0.0
    %679 = vmatpush1.xpose.msra.mxu0 0.0
    %680 = vmatprep.subr.mxu0 0.0
    %681 = vmatpush1.xpose.msra.mxu0 0.0
    %682 = vmatprep.subr.mxu0 0.0
    %683 = vmatpush1.xpose.msra.mxu0 0.0
    %684 = vmatprep.subr.mxu0 0.0
    %685 = vmatpush1.xpose.msra.mxu0 0.0
    %686 = vmatprep.subr.mxu0 0.0
    %687 = vmatpush1.xpose.msra.mxu0 0.0
    %688 = vmatprep.subr.mxu0 0.0
    %689 = vmatpush1.xpose.msra.mxu0 0.0
    %690 = vmatprep.subr.mxu0 0.0
    %691 = vmatpush1.xpose.msra.mxu0 0.0
    %692 = vmatprep.subr.mxu0 0.0
    %693 = vmatpush1.xpose.msra.mxu0 0.0
    %694 = vmatprep.subr.mxu0 0.0
    %695 = vmatpush1.xpose.msra.mxu0 0.0
    %696 = vmatprep.subr.mxu0 0.0
    %697 = vmatpush1.xpose.msra.mxu0 0.0
    %698 = vmatprep.subr.mxu0 0.0
    %699 = vmatpush1.xpose.msra.mxu0 0.0
    %700 = vmatprep.subr.mxu0 0.0
    %701 = vmatpush1.xpose.msra.mxu0 0.0
    %702 = vmatprep.subr.mxu0 0.0
    %703 = vmatpush1.xpose.msra.mxu0 0.0
    %704 = vmatprep.subr.mxu0 0.0
    %705 = vmatpush1.xpose.msra.mxu0 0.0
    %706 = vmatprep.subr.mxu0 0.0
    %707 = vmatpush1.xpose.msra.mxu0 0.0
    %708 = vmatprep.subr.mxu0 0.0
    %709 = vmatpush1.xpose.msra.mxu0 0.0
    %710 = vmatprep.mubr.f32.mxu0 0.0
    %711 = vmatmul.mubr.f32.gmra.mrb[0].mxu0 %v642
    %v712 = vpop.f32.mrb[0].mxu0
    %v713 = vadd.f32 0.0, %v712
    %v714 = vpop.f32.mrb[0].mxu0
    %715 = vdwg.mxu0
    %v716 = vsel %vm165, %v713, -inf
    %717 = vmax.xlane.f32.xlu0 %v716
    %v718 = vpop.xlane.xlu0 %717
    %v719 = vsub.f32 %v713, %v718
    %v720 = vmul.f32 %v719, 1.442695
    %v721 = vpow.pop %v720
    %v722 = vsel %vm165, %v721, 0.0
    %723 = vadd.xlane.f32.xlu0 %v722
    %v724 = vpop.xlane.xlu0 %723
    %v725 = vrcp.pop %v724
    %v726 = vmul.f32 %v721, %v725
    %727 = vrot.lane.b32.xlu0 %v149, 48
    %v728 = vpop.permute.xlu0 %727
    %v731 = vsel %vm165, %v726, 0
    %733 = vmatprep.subr.mxu0 0.0
    %734 = vmatpush1.msra.mxu0 %v728
    %735 = vmatprep.subr.mxu0 0.0
    %736 = vmatpush1.msra.mxu0 0.0
    %737 = vmatprep.subr.mxu0 0.0
    %738 = vmatpush1.msra.mxu0 0.0
    %739 = vmatprep.subr.mxu0 0.0
    %740 = vmatpush1.msra.mxu0 0.0
    %741 = vmatprep.subr.mxu0 0.0
    %742 = vmatpush1.msra.mxu0 0.0
    %743 = vmatprep.subr.mxu0 0.0
    %744 = vmatpush1.msra.mxu0 0.0
    %745 = vmatprep.subr.mxu0 0.0
    %746 = vmatpush1.msra.mxu0 0.0
    %747 = vmatprep.subr.mxu0 0.0
    %748 = vmatpush1.msra.mxu0 0.0
    %749 = vmatprep.subr.mxu0 0.0
    %750 = vmatpush1.msra.mxu0 0.0
    %751 = vmatprep.subr.mxu0 0.0
    %752 = vmatpush1.msra.mxu0 0.0
    %753 = vmatprep.subr.mxu0 0.0
    %754 = vmatpush1.msra.mxu0 0.0
    %755 = vmatprep.subr.mxu0 0.0
    %756 = vmatpush1.msra.mxu0 0.0
    %757 = vmatprep.subr.mxu0 0.0
    %758 = vmatpush1.msra.mxu0 0.0
    %759 = vmatprep.subr.mxu0 0.0
    %760 = vmatpush1.msra.mxu0 0.0
    %761 = vmatprep.subr.mxu0 0.0
    %762 = vmatpush1.msra.mxu0 0.0
    %763 = vmatprep.subr.mxu0 0.0
    %764 = vmatpush1.msra.mxu0 0.0
    %765 = vmatprep.subr.mxu0 0.0
    %766 = vmatpush1.msra.mxu0 0.0
    %767 = vmatprep.subr.mxu0 0.0
    %768 = vmatpush1.msra.mxu0 0.0
    %769 = vmatprep.subr.mxu0 0.0
    %770 = vmatpush1.msra.mxu0 0.0
    %771 = vmatprep.subr.mxu0 0.0
    %772 = vmatpush1.msra.mxu0 0.0
    %773 = vmatprep.subr.mxu0 0.0
    %774 = vmatpush1.msra.mxu0 0.0
    %775 = vmatprep.subr.mxu0 0.0
    %776 = vmatpush1.msra.mxu0 0.0
    %777 = vmatprep.subr.mxu0 0.0
    %778 = vmatpush1.msra.mxu0 0.0
    %779 = vmatprep.subr.mxu0 0.0
    %780 = vmatpush1.msra.mxu0 0.0
    %781 = vmatprep.subr.mxu0 0.0
    %782 = vmatpush1.msra.mxu0 0.0
    %783 = vmatprep.subr.mxu0 0.0
    %784 = vmatpush1.msra.mxu0 0.0
    %785 = vmatprep.subr.mxu0 0.0
    %786 = vmatpush1.msra.mxu0 0.0
    %787 = vmatprep.subr.mxu0 0.0
    %788 = vmatpush1.msra.mxu0 0.0
    %789 = vmatprep.subr.mxu0 0.0
    %790 = vmatpush1.msra.mxu0 0.0
    %791 = vmatprep.subr.mxu0 0.0
    %792 = vmatpush1.msra.mxu0 0.0
    %793 = vmatprep.subr.mxu0 0.0
    %794 = vmatpush1.msra.mxu0 0.0
    %795 = vmatprep.subr.mxu0 0.0
    %796 = vmatpush1.msra.mxu0 0.0
    %797 = vmatprep.mubr.f32.mxu0 0.0
    %798 = vmatmul.mubr.f32.gmra.mrb[0].mxu0 %v731
    %v799 = vpop.f32.mrb[0].mxu0
    %v800 = vadd.f32 0.0, %v799
    %v801 = vpop.f32.mrb[0].mxu0
    %802 = vdwg.mxu0
    %v804 = vsel %vm165, %v800, 0
    %806 = vmatprep.subr.mxu0 0.0
    %807 = vmatpush1.msra.mxu0 %v159
    %808 = vmatprep.subr.mxu0 0.0
    %809 = vmatpush1.msra.mxu0 0.0
    %810 = vmatprep.subr.mxu0 0.0
    %811 = vmatpush1.msra.mxu0 0.0
    %812 = vmatprep.subr.mxu0 0.0
    %813 = vmatpush1.msra.mxu0 0.0
    %814 = vmatprep.subr.mxu0 0.0
    %815 = vmatpush1.msra.mxu0 0.0
    %816 = vmatprep.subr.mxu0 0.0
    %817 = vmatpush1.msra.mxu0 0.0
    %818 = vmatprep.subr.mxu0 0.0
    %819 = vmatpush1.msra.mxu0 0.0
    %820 = vmatprep.subr.mxu0 0.0
    %821 = vmatpush1.msra.mxu0 0.0
    %822 = vmatprep.subr.mxu0 0.0
    %823 = vmatpush1.msra.mxu0 0.0
    %824 = vmatprep.subr.mxu0 0.0
    %825 = vmatpush1.msra.mxu0 0.0
    %826 = vmatprep.subr.mxu0 0.0
    %827 = vmatpush1.msra.mxu0 0.0
    %828 = vmatprep.subr.mxu0 0.0
    %829 = vmatpush1.msra.mxu0 0.0
    %830 = vmatprep.subr.mxu0 0.0
    %831 = vmatpush1.msra.mxu0 0.0
    %832 = vmatprep.subr.mxu0 0.0
    %833 = vmatpush1.msra.mxu0 0.0
    %834 = vmatprep.subr.mxu0 0.0
    %835 = vmatpush1.msra.mxu0 0.0
    %836 = vmatprep.subr.mxu0 0.0
    %837 = vmatpush1.msra.mxu0 0.0
    %838 = vmatprep.subr.mxu0 0.0
    %839 = vmatpush1.msra.mxu0 0.0
    %840 = vmatprep.subr.mxu0 0.0
    %841 = vmatpush1.msra.mxu0 0.0
    %842 = vmatprep.subr.mxu0 0.0
    %843 = vmatpush1.msra.mxu0 0.0
    %844 = vmatprep.subr.mxu0 0.0
    %845 = vmatpush1.msra.mxu0 0.0
    %846 = vmatprep.subr.mxu0 0.0
    %847 = vmatpush1.msra.mxu0 0.0
    %848 = vmatprep.subr.mxu0 0.0
    %849 = vmatpush1.msra.mxu0 0.0
    %850 = vmatprep.subr.mxu0 0.0
    %851 = vmatpush1.msra.mxu0 0.0
    %852 = vmatprep.subr.mxu0 0.0
    %853 = vmatpush1.msra.mxu0 0.0
    %854 = vmatprep.subr.mxu0 0.0
    %855 = vmatpush1.msra.mxu0 0.0
    %856 = vmatprep.subr.mxu0 0.0
    %857 = vmatpush1.msra.mxu0 0.0
    %858 = vmatprep.subr.mxu0 0.0
    %859 = vmatpush1.msra.mxu0 0.0
    %860 = vmatprep.subr.mxu0 0.0
    %861 = vmatpush1.msra.mxu0 0.0
    %862 = vmatprep.subr.mxu0 0.0
    %863 = vmatpush1.msra.mxu0 0.0
    %864 = vmatprep.subr.mxu0 0.0
    %865 = vmatpush1.msra.mxu0 0.0
    %866 = vmatprep.subr.mxu0 0.0
    %867 = vmatpush1.msra.mxu0 0.0
    %868 = vmatprep.subr.mxu0 0.0
    %869 = vmatpush1.msra.mxu0 0.0
    %870 = vmatprep.mubr.f32.mxu0 0.0
    %871 = vmatmul.mubr.f32.gmra.mrb[0].mxu0 %v804
    %v872 = vpop.f32.mrb[0].mxu0
    %v873 = vadd.f32 0.0, %v872
    %v874 = vpop.f32.mrb[0].mxu0
    %875 = vdwg.mxu0
    %v876 = vadd.f32 %v635, %v873
    %877 = vrot.lane.b32.xlu0 %v149, 104
    %v878 = vpop.permute.xlu0 %877
    %879 = vrot.lane.b32.xlu0 %v149, 72
    %v880 = vpop.permute.xlu0 %879
    %v881 = vsel %vm165, %v878, 0
    %v883 = vsel %vm165, %v880, 0
    %885 = vmatprep.subr.mxu0 0.0
    %886 = vmatpush1.xpose.msra.mxu0 %v883
    %887 = vmatprep.subr.mxu0 0.0
    %888 = vmatpush1.xpose.msra.mxu0 0.0
    %889 = vmatprep.subr.mxu0 0.0
    %890 = vmatpush1.xpose.msra.mxu0 0.0
    %891 = vmatprep.subr.mxu0 0.0
    %892 = vmatpush1.xpose.msra.mxu0 0.0
    %893 = vmatprep.subr.mxu0 0.0
    %894 = vmatpush1.xpose.msra.mxu0 0.0
    %895 = vmatprep.subr.mxu0 0.0
    %896 = vmatpush1.xpose.msra.mxu0 0.0
    %897 = vmatprep.subr.mxu0 0.0
    %898 = vmatpush1.xpose.msra.mxu0 0.0
    %899 = vmatprep.subr.mxu0 0.0
    %900 = vmatpush1.xpose.msra.mxu0 0.0
    %901 = vmatprep.subr.mxu0 0.0
    %902 = vmatpush1.xpose.msra.mxu0 0.0
    %903 = vmatprep.subr.mxu0 0.0
    %904 = vmatpush1.xpose.msra.mxu0 0.0
    %905 = vmatprep.subr.mxu0 0.0
    %906 = vmatpush1.xpose.msra.mxu0 0.0
    %907 = vmatprep.subr.mxu0 0.0
    %908 = vmatpush1.xpose.msra.mxu0 0.0
    %909 = vmatprep.subr.mxu0 0.0
    %910 = vmatpush1.xpose.msra.mxu0 0.0
    %911 = vmatprep.subr.mxu0 0.0
    %912 = vmatpush1.xpose.msra.mxu0 0.0
    %913 = vmatprep.subr.mxu0 0.0
    %914 = vmatpush1.xpose.msra.mxu0 0.0
    %915 = vmatprep.subr.mxu0 0.0
    %916 = vmatpush1.xpose.msra.mxu0 0.0
    %917 = vmatprep.subr.mxu0 0.0
    %918 = vmatpush1.xpose.msra.mxu0 0.0
    %919 = vmatprep.subr.mxu0 0.0
    %920 = vmatpush1.xpose.msra.mxu0 0.0
    %921 = vmatprep.subr.mxu0 0.0
    %922 = vmatpush1.xpose.msra.mxu0 0.0
    %923 = vmatprep.subr.mxu0 0.0
    %924 = vmatpush1.xpose.msra.mxu0 0.0
    %925 = vmatprep.subr.mxu0 0.0
    %926 = vmatpush1.xpose.msra.mxu0 0.0
    %927 = vmatprep.subr.mxu0 0.0
    %928 = vmatpush1.xpose.msra.mxu0 0.0
    %929 = vmatprep.subr.mxu0 0.0
    %930 = vmatpush1.xpose.msra.mxu0 0.0
    %931 = vmatprep.subr.mxu0 0.0
    %932 = vmatpush1.xpose.msra.mxu0 0.0
    %933 = vmatprep.subr.mxu0 0.0
    %934 = vmatpush1.xpose.msra.mxu0 0.0
    %935 = vmatprep.subr.mxu0 0.0
    %936 = vmatpush1.xpose.msra.mxu0 0.0
    %937 = vmatprep.subr.mxu0 0.0
    %938 = vmatpush1.xpose.msra.mxu0 0.0
    %939 = vmatprep.subr.mxu0 0.0
    %940 = vmatpush1.xpose.msra.mxu0 0.0
    %941 = vmatprep.subr.mxu0 0.0
    %942 = vmatpush1.xpose.msra.mxu0 0.0
    %943 = vmatprep.subr.mxu0 0.0
    %944 = vmatpush1.xpose.msra.mxu0 0.0
    %945 = vmatprep.subr.mxu0 0.0
    %946 = vmatpush1.xpose.msra.mxu0 0.0
    %947 = vmatprep.subr.mxu0 0.0
    %948 = vmatpush1.xpose.msra.mxu0 0.0
    %949 = vmatprep.mubr.f32.mxu0 0.0
    %950 = vmatmul.mubr.f32.gmra.mrb[0].mxu0 %v881
    %v951 = vpop.f32.mrb[0].mxu0
    %v952 = vadd.f32 0.0, %v951
    %v953 = vpop.f32.mrb[0].mxu0
    %954 = vdwg.mxu0
    %v955 = vsel %vm165, %v952, -inf
    %956 = vmax.xlane.f32.xlu0 %v955
    %v957 = vpop.xlane.xlu0 %956
    %v958 = vsub.f32 %v952, %v957
    %v959 = vmul.f32 %v958, 1.442695
    %v960 = vpow.pop %v959
    %v961 = vsel %vm165, %v960, 0.0
    %962 = vadd.xlane.f32.xlu0 %v961
    %v963 = vpop.xlane.xlu0 %962
    %v964 = vrcp.pop %v963
    %v965 = vmul.f32 %v960, %v964
    %966 = vrot.lane.b32.xlu0 %v149, 40
    %v967 = vpop.permute.xlu0 %966
    %v970 = vsel %vm165, %v965, 0
    %972 = vmatprep.subr.mxu0 0.0
    %973 = vmatpush1.msra.mxu0 %v967
    %974 = vmatprep.subr.mxu0 0.0
    %975 = vmatpush1.msra.mxu0 0.0
    %976 = vmatprep.subr.mxu0 0.0
    %977 = vmatpush1.msra.mxu0 0.0
    %978 = vmatprep.subr.mxu0 0.0
    %979 = vmatpush1.msra.mxu0 0.0
    %980 = vmatprep.subr.mxu0 0.0
    %981 = vmatpush1.msra.mxu0 0.0
    %982 = vmatprep.subr.mxu0 0.0
    %983 = vmatpush1.msra.mxu0 0.0
    %984 = vmatprep.subr.mxu0 0.0
    %985 = vmatpush1.msra.mxu0 0.0
    %986 = vmatprep.subr.mxu0 0.0
    %987 = vmatpush1.msra.mxu0 0.0
    %988 = vmatprep.subr.mxu0 0.0
    %989 = vmatpush1.msra.mxu0 0.0
    %990 = vmatprep.subr.mxu0 0.0
    %991 = vmatpush1.msra.mxu0 0.0
    %992 = vmatprep.subr.mxu0 0.0
    %993 = vmatpush1.msra.mxu0 0.0
    %994 = vmatprep.subr.mxu0 0.0
    %995 = vmatpush1.msra.mxu0 0.0
    %996 = vmatprep.subr.mxu0 0.0
    %997 = vmatpush1.msra.mxu0 0.0
    %998 = vmatprep.subr.mxu0 0.0
    %999 = vmatpush1.msra.mxu0 0.0
    %1000 = vmatprep.subr.mxu0 0.0
    %1001 = vmatpush1.msra.mxu0 0.0
    %1002 = vmatprep.subr.mxu0 0.0
    %1003 = vmatpush1.msra.mxu0 0.0
    %1004 = vmatprep.subr.mxu0 0.0
    %1005 = vmatpush1.msra.mxu0 0.0
    %1006 = vmatprep.subr.mxu0 0.0
    %1007 = vmatpush1.msra.mxu0 0.0
    %1008 = vmatprep.subr.mxu0 0.0
    %1009 = vmatpush1.msra.mxu0 0.0
    %1010 = vmatprep.subr.mxu0 0.0
    %1011 = vmatpush1.msra.mxu0 0.0
    %1012 = vmatprep.subr.mxu0 0.0
    %1013 = vmatpush1.msra.mxu0 0.0
    %1014 = vmatprep.subr.mxu0 0.0
    %1015 = vmatpush1.msra.mxu0 0.0
    %1016 = vmatprep.subr.mxu0 0.0
    %1017 = vmatpush1.msra.mxu0 0.0
    %1018 = vmatprep.subr.mxu0 0.0
    %1019 = vmatpush1.msra.mxu0 0.0
    %1020 = vmatprep.subr.mxu0 0.0
    %1021 = vmatpush1.msra.mxu0 0.0
    %1022 = vmatprep.subr.mxu0 0.0
    %1023 = vmatpush1.msra.mxu0 0.0
    %1024 = vmatprep.subr.mxu0 0.0
    %1025 = vmatpush1.msra.mxu0 0.0
    %1026 = vmatprep.subr.mxu0 0.0
    %1027 = vmatpush1.msra.mxu0 0.0
    %1028 = vmatprep.subr.mxu0 0.0
    %1029 = vmatpush1.msra.mxu0 0.0
    %1030 = vmatprep.subr.mxu0 0.0
    %1031 = vmatpush1.msra.mxu0 0.0
    %1032 = vmatprep.subr.mxu0 0.0
    %1033 = vmatpush1.msra.mxu0 0.0
    %1034 = vmatprep.subr.mxu0 0.0
    %1035 = vmatpush1.msra.mxu0 0.0
    %1036 = vmatprep.mubr.f32.mxu0 0.0
    %1037 = vmatmul.mubr.f32.gmra.mrb[0].mxu0 %v970
    %v1038 = vpop.f32.mrb[0].mxu0
    %v1039 = vadd.f32 0.0, %v1038
    %v1040 = vpop.f32.mrb[0].mxu0
    %1041 = vdwg.mxu0
    %v1043 = vsel %vm165, %v1039, 0
    %1045 = vmatprep.subr.mxu0 0.0
    %1046 = vmatpush1.msra.mxu0 %v160
    %1047 = vmatprep.subr.mxu0 0.0
    %1048 = vmatpush1.msra.mxu0 0.0
    %1049 = vmatprep.subr.mxu0 0.0
    %1050 = vmatpush1.msra.mxu0 0.0
    %1051 = vmatprep.subr.mxu0 0.0
    %1052 = vmatpush1.msra.mxu0 0.0
    %1053 = vmatprep.subr.mxu0 0.0
    %1054 = vmatpush1.msra.mxu0 0.0
    %1055 = vmatprep.subr.mxu0 0.0
    %1056 = vmatpush1.msra.mxu0 0.0
    %1057 = vmatprep.subr.mxu0 0.0
    %1058 = vmatpush1.msra.mxu0 0.0
    %1059 = vmatprep.subr.mxu0 0.0
    %1060 = vmatpush1.msra.mxu0 0.0
    %1061 = vmatprep.subr.mxu0 0.0
    %1062 = vmatpush1.msra.mxu0 0.0
    %1063 = vmatprep.subr.mxu0 0.0
    %1064 = vmatpush1.msra.mxu0 0.0
    %1065 = vmatprep.subr.mxu0 0.0
    %1066 = vmatpush1.msra.mxu0 0.0
    %1067 = vmatprep.subr.mxu0 0.0
    %1068 = vmatpush1.msra.mxu0 0.0
    %1069 = vmatprep.subr.mxu0 0.0
    %1070 = vmatpush1.msra.mxu0 0.0
    %1071 = vmatprep.subr.mxu0 0.0
    %1072 = vmatpush1.msra.mxu0 0.0
    %1073 = vmatprep.subr.mxu0 0.0
    %1074 = vmatpush1.msra.mxu0 0.0
    %1075 = vmatprep.subr.mxu0 0.0
    %1076 = vmatpush1.msra.mxu0 0.0
    %1077 = vmatprep.subr.mxu0 0.0
    %1078 = vmatpush1.msra.mxu0 0.0
    %1079 = vmatprep.subr.mxu0 0.0
    %1080 = vmatpush1.msra.mxu0 0.0
    %1081 = vmatprep.subr.mxu0 0.0
    %1082 = vmatpush1.msra.mxu0 0.0
    %1083 = vmatprep.subr.mxu0 0.0
    %1084 = vmatpush1.msra.mxu0 0.0
    %1085 = vmatprep.subr.mxu0 0.0
    %1086 = vmatpush1.msra.mxu0 0.0
    %1087 = vmatprep.subr.mxu0 0.0
    %1088 = vmatpush1.msra.mxu0 0.0
    %1089 = vmatprep.subr.mxu0 0.0
    %1090 = vmatpush1.msra.mxu0 0.0
    %1091 = vmatprep.subr.mxu0 0.0
    %1092 = vmatpush1.msra.mxu0 0.0
    %1093 = vmatprep.subr.mxu0 0.0
    %1094 = vmatpush1.msra.mxu0 0.0
    %1095 = vmatprep.subr.mxu0 0.0
    %1096 = vmatpush1.msra.mxu0 0.0
    %1097 = vmatprep.subr.mxu0 0.0
    %1098 = vmatpush1.msra.mxu0 0.0
    %1099 = vmatprep.subr.mxu0 0.0
    %1100 = vmatpush1.msra.mxu0 0.0
    %1101 = vmatprep.subr.mxu0 0.0
    %1102 = vmatpush1.msra.mxu0 0.0
    %1103 = vmatprep.subr.mxu0 0.0
    %1104 = vmatpush1.msra.mxu0 0.0
    %1105 = vmatprep.subr.mxu0 0.0
    %1106 = vmatpush1.msra.mxu0 0.0
    %1107 = vmatprep.subr.mxu0 0.0
    %1108 = vmatpush1.msra.mxu0 0.0
    %1109 = vmatprep.mubr.f32.mxu0 0.0
    %1110 = vmatmul.mubr.f32.gmra.mrb[0].mxu0 %v1043
    %v1111 = vpop.f32.mrb[0].mxu0
    %v1112 = vadd.f32 0.0, %v1111
    %v1113 = vpop.f32.mrb[0].mxu0
    %1114 = vdwg.mxu0
    %v1115 = vadd.f32 %v876, %v1112
    %v1117 = vlaneseq
    %v1118 = vshrl.u32 %v1117, 7
    %v1119 = vsub.s32 0, %v1118
    %v1120 = vrot.slane %v161, %v1119
    %v1122 = vadd.f32 %v1115, %v1120
    %1123 = vst.msk [vmem:[#allocation8] sm:$0xff] %vm75, %v1122
    %1125 = vrot.lane.b32.xlu0 %v154, 96
    %v1126 = vpop.permute.xlu0 %1125
    %v1127 = vsel %vm165, %v154, 0
    %v1129 = vsel %vm165, %v1126, 0
    %1131 = vmatprep.subr.mxu0 0.0
    %1132 = vmatpush1.xpose.msra.mxu0 %v1129
    %1133 = vmatprep.subr.mxu0 0.0
    %1134 = vmatpush1.xpose.msra.mxu0 0.0
    %1135 = vmatprep.subr.mxu0 0.0
    %1136 = vmatpush1.xpose.msra.mxu0 0.0
    %1137 = vmatprep.subr.mxu0 0.0
    %1138 = vmatpush1.xpose.msra.mxu0 0.0
    %1139 = vmatprep.subr.mxu0 0.0
    %1140 = vmatpush1.xpose.msra.mxu0 0.0
    %1141 = vmatprep.subr.mxu0 0.0
    %1142 = vmatpush1.xpose.msra.mxu0 0.0
    %1143 = vmatprep.subr.mxu0 0.0
    %1144 = vmatpush1.xpose.msra.mxu0 0.0
    %1145 = vmatprep.subr.mxu0 0.0
    %1146 = vmatpush1.xpose.msra.mxu0 0.0
    %1147 = vmatprep.subr.mxu0 0.0
    %1148 = vmatpush1.xpose.msra.mxu0 0.0
    %1149 = vmatprep.subr.mxu0 0.0
    %1150 = vmatpush1.xpose.msra.mxu0 0.0
    %1151 = vmatprep.subr.mxu0 0.0
    %1152 = vmatpush1.xpose.msra.mxu0 0.0
    %1153 = vmatprep.subr.mxu0 0.0
    %1154 = vmatpush1.xpose.msra.mxu0 0.0
    %1155 = vmatprep.subr.mxu0 0.0
    %1156 = vmatpush1.xpose.msra.mxu0 0.0
    %1157 = vmatprep.subr.mxu0 0.0
    %1158 = vmatpush1.xpose.msra.mxu0 0.0
    %1159 = vmatprep.subr.mxu0 0.0
    %1160 = vmatpush1.xpose.msra.mxu0 0.0
    %1161 = vmatprep.subr.mxu0 0.0
    %1162 = vmatpush1.xpose.msra.mxu0 0.0
    %1163 = vmatprep.subr.mxu0 0.0
    %1164 = vmatpush1.xpose.msra.mxu0 0.0
    %1165 = vmatprep.subr.mxu0 0.0
    %1166 = vmatpush1.xpose.msra.mxu0 0.0
    %1167 = vmatprep.subr.mxu0 0.0
    %1168 = vmatpush1.xpose.msra.mxu0 0.0
    %1169 = vmatprep.subr.mxu0 0.0
    %1170 = vmatpush1.xpose.msra.mxu0 0.0
    %1171 = vmatprep.subr.mxu0 0.0
    %1172 = vmatpush1.xpose.msra.mxu0 0.0
    %1173 = vmatprep.subr.mxu0 0.0
    %1174 = vmatpush1.xpose.msra.mxu0 0.0
    %1175 = vmatprep.subr.mxu0 0.0
    %1176 = vmatpush1.xpose.msra.mxu0 0.0
    %1177 = vmatprep.subr.mxu0 0.0
    %1178 = vmatpush1.xpose.msra.mxu0 0.0
    %1179 = vmatprep.subr.mxu0 0.0
    %1180 = vmatpush1.xpose.msra.mxu0 0.0
    %1181 = vmatprep.subr.mxu0 0.0
    %1182 = vmatpush1.xpose.msra.mxu0 0.0
    %1183 = vmatprep.subr.mxu0 0.0
    %1184 = vmatpush1.xpose.msra.mxu0 0.0
    %1185 = vmatprep.subr.mxu0 0.0
    %1186 = vmatpush1.xpose.msra.mxu0 0.0
    %1187 = vmatprep.subr.mxu0 0.0
    %1188 = vmatpush1.xpose.msra.mxu0 0.0
    %1189 = vmatprep.subr.mxu0 0.0
    %1190 = vmatpush1.xpose.msra.mxu0 0.0
    %1191 = vmatprep.subr.mxu0 0.0
    %1192 = vmatpush1.xpose.msra.mxu0 0.0
    %1193 = vmatprep.subr.mxu0 0.0
    %1194 = vmatpush1.xpose.msra.mxu0 0.0
    %1195 = vmatprep.mubr.f32.mxu0 0.0
    %1196 = vmatmul.mubr.f32.gmra.mrb[0].mxu0 %v1127
    %v1197 = vpop.f32.mrb[0].mxu0
    %v1198 = vadd.f32 0.0, %v1197
    %v1199 = vpop.f32.mrb[0].mxu0
    %1200 = vdwg.mxu0
    %v1201 = vsel %vm165, %v1198, -inf
    %1202 = vmax.xlane.f32.xlu0 %v1201
    %v1203 = vpop.xlane.xlu0 %1202
    %v1204 = vsub.f32 %v1198, %v1203
    %v1205 = vmul.f32 %v1204, 1.442695
    %v1206 = vpow.pop %v1205
    %v1207 = vsel %vm165, %v1206, 0.0
    %1208 = vadd.xlane.f32.xlu0 %v1207
    %v1209 = vpop.xlane.xlu0 %1208
    %v1210 = vrcp.pop %v1209
    %v1211 = vmul.f32 %v1206, %v1210
    %1212 = vrot.lane.b32.xlu0 %v154, 64
    %v1213 = vpop.permute.xlu0 %1212
    %v1216 = vsel %vm165, %v1211, 0
    %1218 = vmatprep.subr.mxu0 0.0
    %1219 = vmatpush1.msra.mxu0 %v1213
    %1220 = vmatprep.subr.mxu0 0.0
    %1221 = vmatpush1.msra.mxu0 0.0
    %1222 = vmatprep.subr.mxu0 0.0
    %1223 = vmatpush1.msra.mxu0 0.0
    %1224 = vmatprep.subr.mxu0 0.0
    %1225 = vmatpush1.msra.mxu0 0.0
    %1226 = vmatprep.subr.mxu0 0.0
    %1227 = vmatpush1.msra.mxu0 0.0
    %1228 = vmatprep.subr.mxu0 0.0
    %1229 = vmatpush1.msra.mxu0 0.0
    %1230 = vmatprep.subr.mxu0 0.0
    %1231 = vmatpush1.msra.mxu0 0.0
    %1232 = vmatprep.subr.mxu0 0.0
    %1233 = vmatpush1.msra.mxu0 0.0
    %1234 = vmatprep.subr.mxu0 0.0
    %1235 = vmatpush1.msra.mxu0 0.0
    %1236 = vmatprep.subr.mxu0 0.0
    %1237 = vmatpush1.msra.mxu0 0.0
    %1238 = vmatprep.subr.mxu0 0.0
    %1239 = vmatpush1.msra.mxu0 0.0
    %1240 = vmatprep.subr.mxu0 0.0
    %1241 = vmatpush1.msra.mxu0 0.0
    %1242 = vmatprep.subr.mxu0 0.0
    %1243 = vmatpush1.msra.mxu0 0.0
    %1244 = vmatprep.subr.mxu0 0.0
    %1245 = vmatpush1.msra.mxu0 0.0
    %1246 = vmatprep.subr.mxu0 0.0
    %1247 = vmatpush1.msra.mxu0 0.0
    %1248 = vmatprep.subr.mxu0 0.0
    %1249 = vmatpush1.msra.mxu0 0.0
    %1250 = vmatprep.subr.mxu0 0.0
    %1251 = vmatpush1.msra.mxu0 0.0
    %1252 = vmatprep.subr.mxu0 0.0
    %1253 = vmatpush1.msra.mxu0 0.0
    %1254 = vmatprep.subr.mxu0 0.0
    %1255 = vmatpush1.msra.mxu0 0.0
    %1256 = vmatprep.subr.mxu0 0.0
    %1257 = vmatpush1.msra.mxu0 0.0
    %1258 = vmatprep.subr.mxu0 0.0
    %1259 = vmatpush1.msra.mxu0 0.0
    %1260 = vmatprep.subr.mxu0 0.0
    %1261 = vmatpush1.msra.mxu0 0.0
    %1262 = vmatprep.subr.mxu0 0.0
    %1263 = vmatpush1.msra.mxu0 0.0
    %1264 = vmatprep.subr.mxu0 0.0
    %1265 = vmatpush1.msra.mxu0 0.0
    %1266 = vmatprep.subr.mxu0 0.0
    %1267 = vmatpush1.msra.mxu0 0.0
    %1268 = vmatprep.subr.mxu0 0.0
    %1269 = vmatpush1.msra.mxu0 0.0
    %1270 = vmatprep.subr.mxu0 0.0
    %1271 = vmatpush1.msra.mxu0 0.0
    %1272 = vmatprep.subr.mxu0 0.0
    %1273 = vmatpush1.msra.mxu0 0.0
    %1274 = vmatprep.subr.mxu0 0.0
    %1275 = vmatpush1.msra.mxu0 0.0
    %1276 = vmatprep.subr.mxu0 0.0
    %1277 = vmatpush1.msra.mxu0 0.0
    %1278 = vmatprep.subr.mxu0 0.0
    %1279 = vmatpush1.msra.mxu0 0.0
    %1280 = vmatprep.subr.mxu0 0.0
    %1281 = vmatpush1.msra.mxu0 0.0
    %1282 = vmatprep.mubr.f32.mxu0 0.0
    %1283 = vmatmul.mubr.f32.gmra.mrb[0].mxu0 %v1216
    %v1284 = vpop.f32.mrb[0].mxu0
    %v1285 = vadd.f32 0.0, %v1284
    %v1286 = vpop.f32.mrb[0].mxu0
    %1287 = vdwg.mxu0
    %1288 = vrot.lane.b32.xlu0 %v154, 120
    %v1289 = vpop.permute.xlu0 %1288
    %1290 = vrot.lane.b32.xlu0 %v154, 88
    %v1291 = vpop.permute.xlu0 %1290
    %v1292 = vsel %vm165, %v1289, 0
    %v1294 = vsel %vm165, %v1291, 0
    %1296 = vmatprep.subr.mxu0 0.0
    %1297 = vmatpush1.xpose.msra.mxu0 %v1294
    %1298 = vmatprep.subr.mxu0 0.0
    %1299 = vmatpush1.xpose.msra.mxu0 0.0
    %1300 = vmatprep.subr.mxu0 0.0
    %1301 = vmatpush1.xpose.msra.mxu0 0.0
    %1302 = vmatprep.subr.mxu0 0.0
    %1303 = vmatpush1.xpose.msra.mxu0 0.0
    %1304 = vmatprep.subr.mxu0 0.0
    %1305 = vmatpush1.xpose.msra.mxu0 0.0
    %1306 = vmatprep.subr.mxu0 0.0
    %1307 = vmatpush1.xpose.msra.mxu0 0.0
    %1308 = vmatprep.subr.mxu0 0.0
    %1309 = vmatpush1.xpose.msra.mxu0 0.0
    %1310 = vmatprep.subr.mxu0 0.0
    %1311 = vmatpush1.xpose.msra.mxu0 0.0
    %1312 = vmatprep.subr.mxu0 0.0
    %1313 = vmatpush1.xpose.msra.mxu0 0.0
    %1314 = vmatprep.subr.mxu0 0.0
    %1315 = vmatpush1.xpose.msra.mxu0 0.0
    %1316 = vmatprep.subr.mxu0 0.0
    %1317 = vmatpush1.xpose.msra.mxu0 0.0
    %1318 = vmatprep.subr.mxu0 0.0
    %1319 = vmatpush1.xpose.msra.mxu0 0.0
    %1320 = vmatprep.subr.mxu0 0.0
    %1321 = vmatpush1.xpose.msra.mxu0 0.0
    %1322 = vmatprep.subr.mxu0 0.0
    %1323 = vmatpush1.xpose.msra.mxu0 0.0
    %1324 = vmatprep.subr.mxu0 0.0
    %1325 = vmatpush1.xpose.msra.mxu0 0.0
    %1326 = vmatprep.subr.mxu0 0.0
    %1327 = vmatpush1.xpose.msra.mxu0 0.0
    %1328 = vmatprep.subr.mxu0 0.0
    %1329 = vmatpush1.xpose.msra.mxu0 0.0
    %1330 = vmatprep.subr.mxu0 0.0
    %1331 = vmatpush1.xpose.msra.mxu0 0.0
    %1332 = vmatprep.subr.mxu0 0.0
    %1333 = vmatpush1.xpose.msra.mxu0 0.0
    %1334 = vmatprep.subr.mxu0 0.0
    %1335 = vmatpush1.xpose.msra.mxu0 0.0
    %1336 = vmatprep.subr.mxu0 0.0
    %1337 = vmatpush1.xpose.msra.mxu0 0.0
    %1338 = vmatprep.subr.mxu0 0.0
    %1339 = vmatpush1.xpose.msra.mxu0 0.0
    %1340 = vmatprep.subr.mxu0 0.0
    %1341 = vmatpush1.xpose.msra.mxu0 0.0
    %1342 = vmatprep.subr.mxu0 0.0
    %1343 = vmatpush1.xpose.msra.mxu0 0.0
    %1344 = vmatprep.subr.mxu0 0.0
    %1345 = vmatpush1.xpose.msra.mxu0 0.0
    %1346 = vmatprep.subr.mxu0 0.0
    %1347 = vmatpush1.xpose.msra.mxu0 0.0
    %1348 = vmatprep.subr.mxu0 0.0
    %1349 = vmatpush1.xpose.msra.mxu0 0.0
    %1350 = vmatprep.subr.mxu0 0.0
    %1351 = vmatpush1.xpose.msra.mxu0 0.0
    %1352 = vmatprep.subr.mxu0 0.0
    %1353 = vmatpush1.xpose.msra.mxu0 0.0
    %1354 = vmatprep.subr.mxu0 0.0
    %1355 = vmatpush1.xpose.msra.mxu0 0.0
    %1356 = vmatprep.subr.mxu0 0.0
    %1357 = vmatpush1.xpose.msra.mxu0 0.0
    %1358 = vmatprep.subr.mxu0 0.0
    %1359 = vmatpush1.xpose.msra.mxu0 0.0
    %1360 = vmatprep.mubr.f32.mxu0 0.0
    %1361 = vmatmul.mubr.f32.gmra.mrb[0].mxu0 %v1292
    %v1362 = vpop.f32.mrb[0].mxu0
    %v1363 = vadd.f32 0.0, %v1362
    %v1364 = vpop.f32.mrb[0].mxu0
    %1365 = vdwg.mxu0
    %v1366 = vsel %vm165, %v1363, -inf
    %1367 = vmax.xlane.f32.xlu0 %v1366
    %v1368 = vpop.xlane.xlu0 %1367
    %v1369 = vsub.f32 %v1363, %v1368
    %v1370 = vmul.f32 %v1369, 1.442695
    %v1371 = vpow.pop %v1370
    %v1372 = vsel %vm165, %v1371, 0.0
    %1373 = vadd.xlane.f32.xlu0 %v1372
    %v1374 = vpop.xlane.xlu0 %1373
    %v1375 = vrcp.pop %v1374
    %v1376 = vmul.f32 %v1371, %v1375
    %1377 = vrot.lane.b32.xlu0 %v154, 56
    %v1378 = vpop.permute.xlu0 %1377
    %v1381 = vsel %vm165, %v1376, 0
    %1383 = vmatprep.subr.mxu0 0.0
    %1384 = vmatpush1.msra.mxu0 %v1378
    %1385 = vmatprep.subr.mxu0 0.0
    %1386 = vmatpush1.msra.mxu0 0.0
    %1387 = vmatprep.subr.mxu0 0.0
    %1388 = vmatpush1.msra.mxu0 0.0
    %1389 = vmatprep.subr.mxu0 0.0
    %1390 = vmatpush1.msra.mxu0 0.0
    %1391 = vmatprep.subr.mxu0 0.0
    %1392 = vmatpush1.msra.mxu0 0.0
    %1393 = vmatprep.subr.mxu0 0.0
    %1394 = vmatpush1.msra.mxu0 0.0
    %1395 = vmatprep.subr.mxu0 0.0
    %1396 = vmatpush1.msra.mxu0 0.0
    %1397 = vmatprep.subr.mxu0 0.0
    %1398 = vmatpush1.msra.mxu0 0.0
    %1399 = vmatprep.subr.mxu0 0.0
    %1400 = vmatpush1.msra.mxu0 0.0
    %1401 = vmatprep.subr.mxu0 0.0
    %1402 = vmatpush1.msra.mxu0 0.0
    %1403 = vmatprep.subr.mxu0 0.0
    %1404 = vmatpush1.msra.mxu0 0.0
    %1405 = vmatprep.subr.mxu0 0.0
    %1406 = vmatpush1.msra.mxu0 0.0
    %1407 = vmatprep.subr.mxu0 0.0
    %1408 = vmatpush1.msra.mxu0 0.0
    %1409 = vmatprep.subr.mxu0 0.0
    %1410 = vmatpush1.msra.mxu0 0.0
    %1411 = vmatprep.subr.mxu0 0.0
    %1412 = vmatpush1.msra.mxu0 0.0
    %1413 = vmatprep.subr.mxu0 0.0
    %1414 = vmatpush1.msra.mxu0 0.0
    %1415 = vmatprep.subr.mxu0 0.0
    %1416 = vmatpush1.msra.mxu0 0.0
    %1417 = vmatprep.subr.mxu0 0.0
    %1418 = vmatpush1.msra.mxu0 0.0
    %1419 = vmatprep.subr.mxu0 0.0
    %1420 = vmatpush1.msra.mxu0 0.0
    %1421 = vmatprep.subr.mxu0 0.0
    %1422 = vmatpush1.msra.mxu0 0.0
    %1423 = vmatprep.subr.mxu0 0.0
    %1424 = vmatpush1.msra.mxu0 0.0
    %1425 = vmatprep.subr.mxu0 0.0
    %1426 = vmatpush1.msra.mxu0 0.0
    %1427 = vmatprep.subr.mxu0 0.0
    %1428 = vmatpush1.msra.mxu0 0.0
    %1429 = vmatprep.subr.mxu0 0.0
    %1430 = vmatpush1.msra.mxu0 0.0
    %1431 = vmatprep.subr.mxu0 0.0
    %1432 = vmatpush1.msra.mxu0 0.0
    %1433 = vmatprep.subr.mxu0 0.0
    %1434 = vmatpush1.msra.mxu0 0.0
    %1435 = vmatprep.subr.mxu0 0.0
    %1436 = vmatpush1.msra.mxu0 0.0
    %1437 = vmatprep.subr.mxu0 0.0
    %1438 = vmatpush1.msra.mxu0 0.0
    %1439 = vmatprep.subr.mxu0 0.0
    %1440 = vmatpush1.msra.mxu0 0.0
    %1441 = vmatprep.subr.mxu0 0.0
    %1442 = vmatpush1.msra.mxu0 0.0
    %1443 = vmatprep.subr.mxu0 0.0
    %1444 = vmatpush1.msra.mxu0 0.0
    %1445 = vmatprep.subr.mxu0 0.0
    %1446 = vmatpush1.msra.mxu0 0.0
    %1447 = vmatprep.mubr.f32.mxu0 0.0
    %1448 = vmatmul.mubr.f32.gmra.mrb[0].mxu0 %v1381
    %v1449 = vpop.f32.mrb[0].mxu0
    %v1450 = vadd.f32 0.0, %v1449
    %v1451 = vpop.f32.mrb[0].mxu0
    %1452 = vdwg.mxu0
    %v1454 = vsel %vm165, %v1450, 0
    %1456 = vmatprep.subr.mxu0 0.0
    %1457 = vmatpush1.msra.mxu0 %v158
    %1458 = vmatprep.subr.mxu0 0.0
    %1459 = vmatpush1.msra.mxu0 0.0
    %1460 = vmatprep.subr.mxu0 0.0
    %1461 = vmatpush1.msra.mxu0 0.0
    %1462 = vmatprep.subr.mxu0 0.0
    %1463 = vmatpush1.msra.mxu0 0.0
    %1464 = vmatprep.subr.mxu0 0.0
    %1465 = vmatpush1.msra.mxu0 0.0
    %1466 = vmatprep.subr.mxu0 0.0
    %1467 = vmatpush1.msra.mxu0 0.0
    %1468 = vmatprep.subr.mxu0 0.0
    %1469 = vmatpush1.msra.mxu0 0.0
    %1470 = vmatprep.subr.mxu0 0.0
    %1471 = vmatpush1.msra.mxu0 0.0
    %1472 = vmatprep.subr.mxu0 0.0
    %1473 = vmatpush1.msra.mxu0 0.0
    %1474 = vmatprep.subr.mxu0 0.0
    %1475 = vmatpush1.msra.mxu0 0.0
    %1476 = vmatprep.subr.mxu0 0.0
    %1477 = vmatpush1.msra.mxu0 0.0
    %1478 = vmatprep.subr.mxu0 0.0
    %1479 = vmatpush1.msra.mxu0 0.0
    %1480 = vmatprep.subr.mxu0 0.0
    %1481 = vmatpush1.msra.mxu0 0.0
    %1482 = vmatprep.subr.mxu0 0.0
    %1483 = vmatpush1.msra.mxu0 0.0
    %1484 = vmatprep.subr.mxu0 0.0
    %1485 = vmatpush1.msra.mxu0 0.0
    %1486 = vmatprep.subr.mxu0 0.0
    %1487 = vmatpush1.msra.mxu0 0.0
    %1488 = vmatprep.subr.mxu0 0.0
    %1489 = vmatpush1.msra.mxu0 0.0
    %1490 = vmatprep.subr.mxu0 0.0
    %1491 = vmatpush1.msra.mxu0 0.0
    %1492 = vmatprep.subr.mxu0 0.0
    %1493 = vmatpush1.msra.mxu0 0.0
    %1494 = vmatprep.subr.mxu0 0.0
    %1495 = vmatpush1.msra.mxu0 0.0
    %1496 = vmatprep.subr.mxu0 0.0
    %1497 = vmatpush1.msra.mxu0 0.0
    %1498 = vmatprep.subr.mxu0 0.0
    %1499 = vmatpush1.msra.mxu0 0.0
    %1500 = vmatprep.subr.mxu0 0.0
    %1501 = vmatpush1.msra.mxu0 0.0
    %1502 = vmatprep.subr.mxu0 0.0
    %1503 = vmatpush1.msra.mxu0 0.0
    %1504 = vmatprep.subr.mxu0 0.0
    %1505 = vmatpush1.msra.mxu0 0.0
    %1506 = vmatprep.subr.mxu0 0.0
    %1507 = vmatpush1.msra.mxu0 0.0
    %1508 = vmatprep.subr.mxu0 0.0
    %1509 = vmatpush1.msra.mxu0 0.0
    %1510 = vmatprep.subr.mxu0 0.0
    %1511 = vmatpush1.msra.mxu0 0.0
    %1512 = vmatprep.subr.mxu0 0.0
    %1513 = vmatpush1.msra.mxu0 0.0
    %1514 = vmatprep.subr.mxu0 0.0
    %1515 = vmatpush1.msra.mxu0 0.0
    %1516 = vmatprep.subr.mxu0 0.0
    %1517 = vmatpush1.msra.mxu0 0.0
    %1518 = vmatprep.subr.mxu0 0.0
    %1519 = vmatpush1.msra.mxu0 0.0
    %1520 = vmatprep.mubr.f32.mxu0 0.0
    %1521 = vmatmul.mubr.f32.gmra.mrb[0].mxu0 %v1454
    %v1522 = vpop.f32.mrb[0].mxu0
    %v1523 = vadd.f32 0.0, %v1522
    %v1524 = vpop.f32.mrb[0].mxu0
    %1525 = vdwg.mxu0
    %v1527 = vsel %vm165, %v1285, 0
    %1529 = vmatprep.subr.mxu0 0.0
    %1530 = vmatpush1.msra.mxu0 %v157
    %1531 = vmatprep.subr.mxu0 0.0
    %1532 = vmatpush1.msra.mxu0 0.0
    %1533 = vmatprep.subr.mxu0 0.0
    %1534 = vmatpush1.msra.mxu0 0.0
    %1535 = vmatprep.subr.mxu0 0.0
    %1536 = vmatpush1.msra.mxu0 0.0
    %1537 = vmatprep.subr.mxu0 0.0
    %1538 = vmatpush1.msra.mxu0 0.0
    %1539 = vmatprep.subr.mxu0 0.0
    %1540 = vmatpush1.msra.mxu0 0.0
    %1541 = vmatprep.subr.mxu0 0.0
    %1542 = vmatpush1.msra.mxu0 0.0
    %1543 = vmatprep.subr.mxu0 0.0
    %1544 = vmatpush1.msra.mxu0 0.0
    %1545 = vmatprep.subr.mxu0 0.0
    %1546 = vmatpush1.msra.mxu0 0.0
    %1547 = vmatprep.subr.mxu0 0.0
    %1548 = vmatpush1.msra.mxu0 0.0
    %1549 = vmatprep.subr.mxu0 0.0
    %1550 = vmatpush1.msra.mxu0 0.0
    %1551 = vmatprep.subr.mxu0 0.0
    %1552 = vmatpush1.msra.mxu0 0.0
    %1553 = vmatprep.subr.mxu0 0.0
    %1554 = vmatpush1.msra.mxu0 0.0
    %1555 = vmatprep.subr.mxu0 0.0
    %1556 = vmatpush1.msra.mxu0 0.0
    %1557 = vmatprep.subr.mxu0 0.0
    %1558 = vmatpush1.msra.mxu0 0.0
    %1559 = vmatprep.subr.mxu0 0.0
    %1560 = vmatpush1.msra.mxu0 0.0
    %1561 = vmatprep.subr.mxu0 0.0
    %1562 = vmatpush1.msra.mxu0 0.0
    %1563 = vmatprep.subr.mxu0 0.0
    %1564 = vmatpush1.msra.mxu0 0.0
    %1565 = vmatprep.subr.mxu0 0.0
    %1566 = vmatpush1.msra.mxu0 0.0
    %1567 = vmatprep.subr.mxu0 0.0
    %1568 = vmatpush1.msra.mxu0 0.0
    %1569 = vmatprep.subr.mxu0 0.0
    %1570 = vmatpush1.msra.mxu0 0.0
    %1571 = vmatprep.subr.mxu0 0.0
    %1572 = vmatpush1.msra.mxu0 0.0
    %1573 = vmatprep.subr.mxu0 0.0
    %1574 = vmatpush1.msra.mxu0 0.0
    %1575 = vmatprep.subr.mxu0 0.0
    %1576 = vmatpush1.msra.mxu0 0.0
    %1577 = vmatprep.subr.mxu0 0.0
    %1578 = vmatpush1.msra.mxu0 0.0
    %1579 = vmatprep.subr.mxu0 0.0
    %1580 = vmatpush1.msra.mxu0 0.0
    %1581 = vmatprep.subr.mxu0 0.0
    %1582 = vmatpush1.msra.mxu0 0.0
    %1583 = vmatprep.subr.mxu0 0.0
    %1584 = vmatpush1.msra.mxu0 0.0
    %1585 = vmatprep.subr.mxu0 0.0
    %1586 = vmatpush1.msra.mxu0 0.0
    %1587 = vmatprep.subr.mxu0 0.0
    %1588 = vmatpush1.msra.mxu0 0.0
    %1589 = vmatprep.subr.mxu0 0.0
    %1590 = vmatpush1.msra.mxu0 0.0
    %1591 = vmatprep.subr.mxu0 0.0
    %1592 = vmatpush1.msra.mxu0 0.0
    %1593 = vmatprep.mubr.f32.mxu0 0.0
    %1594 = vmatmul.mubr.f32.gmra.mrb[0].mxu0 %v1527
    %v1595 = vpop.f32.mrb[0].mxu0
    %v1596 = vadd.f32 %v1523, %v1595
    %v1597 = vpop.f32.mrb[0].mxu0
    %1598 = vdwg.mxu0
    %1599 = vrot.lane.b32.xlu0 %v154, 112
    %v1600 = vpop.permute.xlu0 %1599
    %1601 = vrot.lane.b32.xlu0 %v154, 80
    %v1602 = vpop.permute.xlu0 %1601
    %v1603 = vsel %vm165, %v1600, 0
    %v1605 = vsel %vm165, %v1602, 0
    %1607 = vmatprep.subr.mxu0 0.0
    %1608 = vmatpush1.xpose.msra.mxu0 %v1605
    %1609 = vmatprep.subr.mxu0 0.0
    %1610 = vmatpush1.xpose.msra.mxu0 0.0
    %1611 = vmatprep.subr.mxu0 0.0
    %1612 = vmatpush1.xpose.msra.mxu0 0.0
    %1613 = vmatprep.subr.mxu0 0.0
    %1614 = vmatpush1.xpose.msra.mxu0 0.0
    %1615 = vmatprep.subr.mxu0 0.0
    %1616 = vmatpush1.xpose.msra.mxu0 0.0
    %1617 = vmatprep.subr.mxu0 0.0
    %1618 = vmatpush1.xpose.msra.mxu0 0.0
    %1619 = vmatprep.subr.mxu0 0.0
    %1620 = vmatpush1.xpose.msra.mxu0 0.0
    %1621 = vmatprep.subr.mxu0 0.0
    %1622 = vmatpush1.xpose.msra.mxu0 0.0
    %1623 = vmatprep.subr.mxu0 0.0
    %1624 = vmatpush1.xpose.msra.mxu0 0.0
    %1625 = vmatprep.subr.mxu0 0.0
    %1626 = vmatpush1.xpose.msra.mxu0 0.0
    %1627 = vmatprep.subr.mxu0 0.0
    %1628 = vmatpush1.xpose.msra.mxu0 0.0
    %1629 = vmatprep.subr.mxu0 0.0
    %1630 = vmatpush1.xpose.msra.mxu0 0.0
    %1631 = vmatprep.subr.mxu0 0.0
    %1632 = vmatpush1.xpose.msra.mxu0 0.0
    %1633 = vmatprep.subr.mxu0 0.0
    %1634 = vmatpush1.xpose.msra.mxu0 0.0
    %1635 = vmatprep.subr.mxu0 0.0
    %1636 = vmatpush1.xpose.msra.mxu0 0.0
    %1637 = vmatprep.subr.mxu0 0.0
    %1638 = vmatpush1.xpose.msra.mxu0 0.0
    %1639 = vmatprep.subr.mxu0 0.0
    %1640 = vmatpush1.xpose.msra.mxu0 0.0
    %1641 = vmatprep.subr.mxu0 0.0
    %1642 = vmatpush1.xpose.msra.mxu0 0.0
    %1643 = vmatprep.subr.mxu0 0.0
    %1644 = vmatpush1.xpose.msra.mxu0 0.0
    %1645 = vmatprep.subr.mxu0 0.0
    %1646 = vmatpush1.xpose.msra.mxu0 0.0
    %1647 = vmatprep.subr.mxu0 0.0
    %1648 = vmatpush1.xpose.msra.mxu0 0.0
    %1649 = vmatprep.subr.mxu0 0.0
    %1650 = vmatpush1.xpose.msra.mxu0 0.0
    %1651 = vmatprep.subr.mxu0 0.0
    %1652 = vmatpush1.xpose.msra.mxu0 0.0
    %1653 = vmatprep.subr.mxu0 0.0
    %1654 = vmatpush1.xpose.msra.mxu0 0.0
    %1655 = vmatprep.subr.mxu0 0.0
    %1656 = vmatpush1.xpose.msra.mxu0 0.0
    %1657 = vmatprep.subr.mxu0 0.0
    %1658 = vmatpush1.xpose.msra.mxu0 0.0
    %1659 = vmatprep.subr.mxu0 0.0
    %1660 = vmatpush1.xpose.msra.mxu0 0.0
    %1661 = vmatprep.subr.mxu0 0.0
    %1662 = vmatpush1.xpose.msra.mxu0 0.0
    %1663 = vmatprep.subr.mxu0 0.0
    %1664 = vmatpush1.xpose.msra.mxu0 0.0
    %1665 = vmatprep.subr.mxu0 0.0
    %1666 = vmatpush1.xpose.msra.mxu0 0.0
    %1667 = vmatprep.subr.mxu0 0.0
    %1668 = vmatpush1.xpose.msra.mxu0 0.0
    %1669 = vmatprep.subr.mxu0 0.0
    %1670 = vmatpush1.xpose.msra.mxu0 0.0
    %1671 = vmatprep.mubr.f32.mxu0 0.0
    %1672 = vmatmul.mubr.f32.gmra.mrb[0].mxu0 %v1603
    %v1673 = vpop.f32.mrb[0].mxu0
    %v1674 = vadd.f32 0.0, %v1673
    %v1675 = vpop.f32.mrb[0].mxu0
    %1676 = vdwg.mxu0
    %v1677 = vsel %vm165, %v1674, -inf
    %1678 = vmax.xlane.f32.xlu0 %v1677
    %v1679 = vpop.xlane.xlu0 %1678
    %v1680 = vsub.f32 %v1674, %v1679
    %v1681 = vmul.f32 %v1680, 1.442695
    %v1682 = vpow.pop %v1681
    %v1683 = vsel %vm165, %v1682, 0.0
    %1684 = vadd.xlane.f32.xlu0 %v1683
    %v1685 = vpop.xlane.xlu0 %1684
    %v1686 = vrcp.pop %v1685
    %v1687 = vmul.f32 %v1682, %v1686
    %1688 = vrot.lane.b32.xlu0 %v154, 48
    %v1689 = vpop.permute.xlu0 %1688
    %v1692 = vsel %vm165, %v1687, 0
    %1694 = vmatprep.subr.mxu0 0.0
    %1695 = vmatpush1.msra.mxu0 %v1689
    %1696 = vmatprep.subr.mxu0 0.0
    %1697 = vmatpush1.msra.mxu0 0.0
    %1698 = vmatprep.subr.mxu0 0.0
    %1699 = vmatpush1.msra.mxu0 0.0
    %1700 = vmatprep.subr.mxu0 0.0
    %1701 = vmatpush1.msra.mxu0 0.0
    %1702 = vmatprep.subr.mxu0 0.0
    %1703 = vmatpush1.msra.mxu0 0.0
    %1704 = vmatprep.subr.mxu0 0.0
    %1705 = vmatpush1.msra.mxu0 0.0
    %1706 = vmatprep.subr.mxu0 0.0
    %1707 = vmatpush1.msra.mxu0 0.0
    %1708 = vmatprep.subr.mxu0 0.0
    %1709 = vmatpush1.msra.mxu0 0.0
    %1710 = vmatprep.subr.mxu0 0.0
    %1711 = vmatpush1.msra.mxu0 0.0
    %1712 = vmatprep.subr.mxu0 0.0
    %1713 = vmatpush1.msra.mxu0 0.0
    %1714 = vmatprep.subr.mxu0 0.0
    %1715 = vmatpush1.msra.mxu0 0.0
    %1716 = vmatprep.subr.mxu0 0.0
    %1717 = vmatpush1.msra.mxu0 0.0
    %1718 = vmatprep.subr.mxu0 0.0
    %1719 = vmatpush1.msra.mxu0 0.0
    %1720 = vmatprep.subr.mxu0 0.0
    %1721 = vmatpush1.msra.mxu0 0.0
    %1722 = vmatprep.subr.mxu0 0.0
    %1723 = vmatpush1.msra.mxu0 0.0
    %1724 = vmatprep.subr.mxu0 0.0
    %1725 = vmatpush1.msra.mxu0 0.0
    %1726 = vmatprep.subr.mxu0 0.0
    %1727 = vmatpush1.msra.mxu0 0.0
    %1728 = vmatprep.subr.mxu0 0.0
    %1729 = vmatpush1.msra.mxu0 0.0
    %1730 = vmatprep.subr.mxu0 0.0
    %1731 = vmatpush1.msra.mxu0 0.0
    %1732 = vmatprep.subr.mxu0 0.0
    %1733 = vmatpush1.msra.mxu0 0.0
    %1734 = vmatprep.subr.mxu0 0.0
    %1735 = vmatpush1.msra.mxu0 0.0
    %1736 = vmatprep.subr.mxu0 0.0
    %1737 = vmatpush1.msra.mxu0 0.0
    %1738 = vmatprep.subr.mxu0 0.0
    %1739 = vmatpush1.msra.mxu0 0.0
    %1740 = vmatprep.subr.mxu0 0.0
    %1741 = vmatpush1.msra.mxu0 0.0
    %1742 = vmatprep.subr.mxu0 0.0
    %1743 = vmatpush1.msra.mxu0 0.0
    %1744 = vmatprep.subr.mxu0 0.0
    %1745 = vmatpush1.msra.mxu0 0.0
    %1746 = vmatprep.subr.mxu0 0.0
    %1747 = vmatpush1.msra.mxu0 0.0
    %1748 = vmatprep.subr.mxu0 0.0
    %1749 = vmatpush1.msra.mxu0 0.0
    %1750 = vmatprep.subr.mxu0 0.0
    %1751 = vmatpush1.msra.mxu0 0.0
    %1752 = vmatprep.subr.mxu0 0.0
    %1753 = vmatpush1.msra.mxu0 0.0
    %1754 = vmatprep.subr.mxu0 0.0
    %1755 = vmatpush1.msra.mxu0 0.0
    %1756 = vmatprep.subr.mxu0 0.0
    %1757 = vmatpush1.msra.mxu0 0.0
    %1758 = vmatprep.mubr.f32.mxu0 0.0
    %1759 = vmatmul.mubr.f32.gmra.mrb[0].mxu0 %v1692
    %v1760 = vpop.f32.mrb[0].mxu0
    %v1761 = vadd.f32 0.0, %v1760
    %v1762 = vpop.f32.mrb[0].mxu0
    %1763 = vdwg.mxu0
    %v1765 = vsel %vm165, %v1761, 0
    %1767 = vmatprep.subr.mxu0 0.0
    %1768 = vmatpush1.msra.mxu0 %v159
    %1769 = vmatprep.subr.mxu0 0.0
    %1770 = vmatpush1.msra.mxu0 0.0
    %1771 = vmatprep.subr.mxu0 0.0
    %1772 = vmatpush1.msra.mxu0 0.0
    %1773 = vmatprep.subr.mxu0 0.0
    %1774 = vmatpush1.msra.mxu0 0.0
    %1775 = vmatprep.subr.mxu0 0.0
    %1776 = vmatpush1.msra.mxu0 0.0
    %1777 = vmatprep.subr.mxu0 0.0
    %1778 = vmatpush1.msra.mxu0 0.0
    %1779 = vmatprep.subr.mxu0 0.0
    %1780 = vmatpush1.msra.mxu0 0.0
    %1781 = vmatprep.subr.mxu0 0.0
    %1782 = vmatpush1.msra.mxu0 0.0
    %1783 = vmatprep.subr.mxu0 0.0
    %1784 = vmatpush1.msra.mxu0 0.0
    %1785 = vmatprep.subr.mxu0 0.0
    %1786 = vmatpush1.msra.mxu0 0.0
    %1787 = vmatprep.subr.mxu0 0.0
    %1788 = vmatpush1.msra.mxu0 0.0
    %1789 = vmatprep.subr.mxu0 0.0
    %1790 = vmatpush1.msra.mxu0 0.0
    %1791 = vmatprep.subr.mxu0 0.0
    %1792 = vmatpush1.msra.mxu0 0.0
    %1793 = vmatprep.subr.mxu0 0.0
    %1794 = vmatpush1.msra.mxu0 0.0
    %1795 = vmatprep.subr.mxu0 0.0
    %1796 = vmatpush1.msra.mxu0 0.0
    %1797 = vmatprep.subr.mxu0 0.0
    %1798 = vmatpush1.msra.mxu0 0.0
    %1799 = vmatprep.subr.mxu0 0.0
    %1800 = vmatpush1.msra.mxu0 0.0
    %1801 = vmatprep.subr.mxu0 0.0
    %1802 = vmatpush1.msra.mxu0 0.0
    %1803 = vmatprep.subr.mxu0 0.0
    %1804 = vmatpush1.msra.mxu0 0.0
    %1805 = vmatprep.subr.mxu0 0.0
    %1806 = vmatpush1.msra.mxu0 0.0
    %1807 = vmatprep.subr.mxu0 0.0
    %1808 = vmatpush1.msra.mxu0 0.0
    %1809 = vmatprep.subr.mxu0 0.0
    %1810 = vmatpush1.msra.mxu0 0.0
    %1811 = vmatprep.subr.mxu0 0.0
    %1812 = vmatpush1.msra.mxu0 0.0
    %1813 = vmatprep.subr.mxu0 0.0
    %1814 = vmatpush1.msra.mxu0 0.0
    %1815 = vmatprep.subr.mxu0 0.0
    %1816 = vmatpush1.msra.mxu0 0.0
    %1817 = vmatprep.subr.mxu0 0.0
    %1818 = vmatpush1.msra.mxu0 0.0
    %1819 = vmatprep.subr.mxu0 0.0
    %1820 = vmatpush1.msra.mxu0 0.0
    %1821 = vmatprep.subr.mxu0 0.0
    %1822 = vmatpush1.msra.mxu0 0.0
    %1823 = vmatprep.subr.mxu0 0.0
    %1824 = vmatpush1.msra.mxu0 0.0
    %1825 = vmatprep.subr.mxu0 0.0
    %1826 = vmatpush1.msra.mxu0 0.0
    %1827 = vmatprep.subr.mxu0 0.0
    %1828 = vmatpush1.msra.mxu0 0.0
    %1829 = vmatprep.subr.mxu0 0.0
    %1830 = vmatpush1.msra.mxu0 0.0
    %1831 = vmatprep.mubr.f32.mxu0 0.0
    %1832 = vmatmul.mubr.f32.gmra.mrb[0].mxu0 %v1765
    %v1833 = vpop.f32.mrb[0].mxu0
    %v1834 = vadd.f32 0.0, %v1833
    %v1835 = vpop.f32.mrb[0].mxu0
    %1836 = vdwg.mxu0
    %v1837 = vadd.f32 %v1596, %v1834
    %1838 = vrot.lane.b32.xlu0 %v154, 104
    %v1839 = vpop.permute.xlu0 %1838
    %1840 = vrot.lane.b32.xlu0 %v154, 72
    %v1841 = vpop.permute.xlu0 %1840
    %v1842 = vsel %vm165, %v1839, 0
    %v1844 = vsel %vm165, %v1841, 0
    %1846 = vmatprep.subr.mxu0 0.0
    %1847 = vmatpush1.xpose.msra.mxu0 %v1844
    %1848 = vmatprep.subr.mxu0 0.0
    %1849 = vmatpush1.xpose.msra.mxu0 0.0
    %1850 = vmatprep.subr.mxu0 0.0
    %1851 = vmatpush1.xpose.msra.mxu0 0.0
    %1852 = vmatprep.subr.mxu0 0.0
    %1853 = vmatpush1.xpose.msra.mxu0 0.0
    %1854 = vmatprep.subr.mxu0 0.0
    %1855 = vmatpush1.xpose.msra.mxu0 0.0
    %1856 = vmatprep.subr.mxu0 0.0
    %1857 = vmatpush1.xpose.msra.mxu0 0.0
    %1858 = vmatprep.subr.mxu0 0.0
    %1859 = vmatpush1.xpose.msra.mxu0 0.0
    %1860 = vmatprep.subr.mxu0 0.0
    %1861 = vmatpush1.xpose.msra.mxu0 0.0
    %1862 = vmatprep.subr.mxu0 0.0
    %1863 = vmatpush1.xpose.msra.mxu0 0.0
    %1864 = vmatprep.subr.mxu0 0.0
    %1865 = vmatpush1.xpose.msra.mxu0 0.0
    %1866 = vmatprep.subr.mxu0 0.0
    %1867 = vmatpush1.xpose.msra.mxu0 0.0
    %1868 = vmatprep.subr.mxu0 0.0
    %1869 = vmatpush1.xpose.msra.mxu0 0.0
    %1870 = vmatprep.subr.mxu0 0.0
    %1871 = vmatpush1.xpose.msra.mxu0 0.0
    %1872 = vmatprep.subr.mxu0 0.0
    %1873 = vmatpush1.xpose.msra.mxu0 0.0
    %1874 = vmatprep.subr.mxu0 0.0
    %1875 = vmatpush1.xpose.msra.mxu0 0.0
    %1876 = vmatprep.subr.mxu0 0.0
    %1877 = vmatpush1.xpose.msra.mxu0 0.0
    %1878 = vmatprep.subr.mxu0 0.0
    %1879 = vmatpush1.xpose.msra.mxu0 0.0
    %1880 = vmatprep.subr.mxu0 0.0
    %1881 = vmatpush1.xpose.msra.mxu0 0.0
    %1882 = vmatprep.subr.mxu0 0.0
    %1883 = vmatpush1.xpose.msra.mxu0 0.0
    %1884 = vmatprep.subr.mxu0 0.0
    %1885 = vmatpush1.xpose.msra.mxu0 0.0
    %1886 = vmatprep.subr.mxu0 0.0
    %1887 = vmatpush1.xpose.msra.mxu0 0.0
    %1888 = vmatprep.subr.mxu0 0.0
    %1889 = vmatpush1.xpose.msra.mxu0 0.0
    %1890 = vmatprep.subr.mxu0 0.0
    %1891 = vmatpush1.xpose.msra.mxu0 0.0
    %1892 = vmatprep.subr.mxu0 0.0
    %1893 = vmatpush1.xpose.msra.mxu0 0.0
    %1894 = vmatprep.subr.mxu0 0.0
    %1895 = vmatpush1.xpose.msra.mxu0 0.0
    %1896 = vmatprep.subr.mxu0 0.0
    %1897 = vmatpush1.xpose.msra.mxu0 0.0
    %1898 = vmatprep.subr.mxu0 0.0
    %1899 = vmatpush1.xpose.msra.mxu0 0.0
    %1900 = vmatprep.subr.mxu0 0.0
    %1901 = vmatpush1.xpose.msra.mxu0 0.0
    %1902 = vmatprep.subr.mxu0 0.0
    %1903 = vmatpush1.xpose.msra.mxu0 0.0
    %1904 = vmatprep.subr.mxu0 0.0
    %1905 = vmatpush1.xpose.msra.mxu0 0.0
    %1906 = vmatprep.subr.mxu0 0.0
    %1907 = vmatpush1.xpose.msra.mxu0 0.0
    %1908 = vmatprep.subr.mxu0 0.0
    %1909 = vmatpush1.xpose.msra.mxu0 0.0
    %1910 = vmatprep.mubr.f32.mxu0 0.0
    %1911 = vmatmul.mubr.f32.gmra.mrb[0].mxu0 %v1842
    %v1912 = vpop.f32.mrb[0].mxu0
    %v1913 = vadd.f32 0.0, %v1912
    %v1914 = vpop.f32.mrb[0].mxu0
    %1915 = vdwg.mxu0
    %v1916 = vsel %vm165, %v1913, -inf
    %1917 = vmax.xlane.f32.xlu0 %v1916
    %v1918 = vpop.xlane.xlu0 %1917
    %v1919 = vsub.f32 %v1913, %v1918
    %v1920 = vmul.f32 %v1919, 1.442695
    %v1921 = vpow.pop %v1920
    %v1922 = vsel %vm165, %v1921, 0.0
    %1923 = vadd.xlane.f32.xlu0 %v1922
    %v1924 = vpop.xlane.xlu0 %1923
    %v1925 = vrcp.pop %v1924
    %v1926 = vmul.f32 %v1921, %v1925
    %1927 = vrot.lane.b32.xlu0 %v154, 40
    %v1928 = vpop.permute.xlu0 %1927
    %v1931 = vsel %vm165, %v1926, 0
    %1933 = vmatprep.subr.mxu0 0.0
    %1934 = vmatpush1.msra.mxu0 %v1928
    %1935 = vmatprep.subr.mxu0 0.0
    %1936 = vmatpush1.msra.mxu0 0.0
    %1937 = vmatprep.subr.mxu0 0.0
    %1938 = vmatpush1.msra.mxu0 0.0
    %1939 = vmatprep.subr.mxu0 0.0
    %1940 = vmatpush1.msra.mxu0 0.0
    %1941 = vmatprep.subr.mxu0 0.0
    %1942 = vmatpush1.msra.mxu0 0.0
    %1943 = vmatprep.subr.mxu0 0.0
    %1944 = vmatpush1.msra.mxu0 0.0
    %1945 = vmatprep.subr.mxu0 0.0
    %1946 = vmatpush1.msra.mxu0 0.0
    %1947 = vmatprep.subr.mxu0 0.0
    %1948 = vmatpush1.msra.mxu0 0.0
    %1949 = vmatprep.subr.mxu0 0.0
    %1950 = vmatpush1.msra.mxu0 0.0
    %1951 = vmatprep.subr.mxu0 0.0
    %1952 = vmatpush1.msra.mxu0 0.0
    %1953 = vmatprep.subr.mxu0 0.0
    %1954 = vmatpush1.msra.mxu0 0.0
    %1955 = vmatprep.subr.mxu0 0.0
    %1956 = vmatpush1.msra.mxu0 0.0
    %1957 = vmatprep.subr.mxu0 0.0
    %1958 = vmatpush1.msra.mxu0 0.0
    %1959 = vmatprep.subr.mxu0 0.0
    %1960 = vmatpush1.msra.mxu0 0.0
    %1961 = vmatprep.subr.mxu0 0.0
    %1962 = vmatpush1.msra.mxu0 0.0
    %1963 = vmatprep.subr.mxu0 0.0
    %1964 = vmatpush1.msra.mxu0 0.0
    %1965 = vmatprep.subr.mxu0 0.0
    %1966 = vmatpush1.msra.mxu0 0.0
    %1967 = vmatprep.subr.mxu0 0.0
    %1968 = vmatpush1.msra.mxu0 0.0
    %1969 = vmatprep.subr.mxu0 0.0
    %1970 = vmatpush1.msra.mxu0 0.0
    %1971 = vmatprep.subr.mxu0 0.0
    %1972 = vmatpush1.msra.mxu0 0.0
    %1973 = vmatprep.subr.mxu0 0.0
    %1974 = vmatpush1.msra.mxu0 0.0
    %1975 = vmatprep.subr.mxu0 0.0
    %1976 = vmatpush1.msra.mxu0 0.0
    %1977 = vmatprep.subr.mxu0 0.0
    %1978 = vmatpush1.msra.mxu0 0.0
    %1979 = vmatprep.subr.mxu0 0.0
    %1980 = vmatpush1.msra.mxu0 0.0
    %1981 = vmatprep.subr.mxu0 0.0
    %1982 = vmatpush1.msra.mxu0 0.0
    %1983 = vmatprep.subr.mxu0 0.0
    %1984 = vmatpush1.msra.mxu0 0.0
    %1985 = vmatprep.subr.mxu0 0.0
    %1986 = vmatpush1.msra.mxu0 0.0
    %1987 = vmatprep.subr.mxu0 0.0
    %1988 = vmatpush1.msra.mxu0 0.0
    %1989 = vmatprep.subr.mxu0 0.0
    %1990 = vmatpush1.msra.mxu0 0.0
    %1991 = vmatprep.subr.mxu0 0.0
    %1992 = vmatpush1.msra.mxu0 0.0
    %1993 = vmatprep.subr.mxu0 0.0
    %1994 = vmatpush1.msra.mxu0 0.0
    %1995 = vmatprep.subr.mxu0 0.0
    %1996 = vmatpush1.msra.mxu0 0.0
    %1997 = vmatprep.mubr.f32.mxu0 0.0
    %1998 = vmatmul.mubr.f32.gmra.mrb[0].mxu0 %v1931
    %v1999 = vpop.f32.mrb[0].mxu0
    %v2000 = vadd.f32 0.0, %v1999
    %v2001 = vpop.f32.mrb[0].mxu0
    %2002 = vdwg.mxu0
    %v2004 = vsel %vm165, %v2000, 0
    %2006 = vmatprep.subr.mxu0 0.0
    %2007 = vmatpush1.msra.mxu0 %v160
    %2008 = vmatprep.subr.mxu0 0.0
    %2009 = vmatpush1.msra.mxu0 0.0
    %2010 = vmatprep.subr.mxu0 0.0
    %2011 = vmatpush1.msra.mxu0 0.0
    %2012 = vmatprep.subr.mxu0 0.0
    %2013 = vmatpush1.msra.mxu0 0.0
    %2014 = vmatprep.subr.mxu0 0.0
    %2015 = vmatpush1.msra.mxu0 0.0
    %2016 = vmatprep.subr.mxu0 0.0
    %2017 = vmatpush1.msra.mxu0 0.0
    %2018 = vmatprep.subr.mxu0 0.0
    %2019 = vmatpush1.msra.mxu0 0.0
    %2020 = vmatprep.subr.mxu0 0.0
    %2021 = vmatpush1.msra.mxu0 0.0
    %2022 = vmatprep.subr.mxu0 0.0
    %2023 = vmatpush1.msra.mxu0 0.0
    %2024 = vmatprep.subr.mxu0 0.0
    %2025 = vmatpush1.msra.mxu0 0.0
    %2026 = vmatprep.subr.mxu0 0.0
    %2027 = vmatpush1.msra.mxu0 0.0
    %2028 = vmatprep.subr.mxu0 0.0
    %2029 = vmatpush1.msra.mxu0 0.0
    %2030 = vmatprep.subr.mxu0 0.0
    %2031 = vmatpush1.msra.mxu0 0.0
    %2032 = vmatprep.subr.mxu0 0.0
    %2033 = vmatpush1.msra.mxu0 0.0
    %2034 = vmatprep.subr.mxu0 0.0
    %2035 = vmatpush1.msra.mxu0 0.0
    %2036 = vmatprep.subr.mxu0 0.0
    %2037 = vmatpush1.msra.mxu0 0.0
    %2038 = vmatprep.subr.mxu0 0.0
    %2039 = vmatpush1.msra.mxu0 0.0
    %2040 = vmatprep.subr.mxu0 0.0
    %2041 = vmatpush1.msra.mxu0 0.0
    %2042 = vmatprep.subr.mxu0 0.0
    %2043 = vmatpush1.msra.mxu0 0.0
    %2044 = vmatprep.subr.mxu0 0.0
    %2045 = vmatpush1.msra.mxu0 0.0
    %2046 = vmatprep.subr.mxu0 0.0
    %2047 = vmatpush1.msra.mxu0 0.0
    %2048 = vmatprep.subr.mxu0 0.0
    %2049 = vmatpush1.msra.mxu0 0.0
    %2050 = vmatprep.subr.mxu0 0.0
    %2051 = vmatpush1.msra.mxu0 0.0
    %2052 = vmatprep.subr.mxu0 0.0
    %2053 = vmatpush1.msra.mxu0 0.0
    %2054 = vmatprep.subr.mxu0 0.0
    %2055 = vmatpush1.msra.mxu0 0.0
    %2056 = vmatprep.subr.mxu0 0.0
    %2057 = vmatpush1.msra.mxu0 0.0
    %2058 = vmatprep.subr.mxu0 0.0
    %2059 = vmatpush1.msra.mxu0 0.0
    %2060 = vmatprep.subr.mxu0 0.0
    %2061 = vmatpush1.msra.mxu0 0.0
    %2062 = vmatprep.subr.mxu0 0.0
    %2063 = vmatpush1.msra.mxu0 0.0
    %2064 = vmatprep.subr.mxu0 0.0
    %2065 = vmatpush1.msra.mxu0 0.0
    %2066 = vmatprep.subr.mxu0 0.0
    %2067 = vmatpush1.msra.mxu0 0.0
    %2068 = vmatprep.subr.mxu0 0.0
    %2069 = vmatpush1.msra.mxu0 0.0
    %2070 = vmatprep.mubr.f32.mxu0 0.0
    %2071 = vmatmul.mubr.f32.gmra.mrb[0].mxu0 %v2004
    %v2072 = vpop.f32.mrb[0].mxu0
    %v2073 = vadd.f32 0.0, %v2072
    %v2074 = vpop.f32.mrb[0].mxu0
    %2075 = vdwg.mxu0
    %v2076 = vadd.f32 %v1837, %v2073
    %v2077 = vadd.f32 %v2076, %v1120
    %2078 = vst.msk [vmem:[#allocation8 + $0x8] sm:$0xff] %vm75, %v2077
    // Predicated region
    $region34: #{tpu_custom_call.1} parent=1 // pred_check
      _
    $region35: #{tpu_custom_call.1} parent=1 // pred_check_branch
      %2080 = sbr.rel (0) target = $region37
    $region36: #{tpu_custom_call.1} parent=1 // pred_region
      %s2082 = ssub.s32 256, 256
      %2083 = vsyncadd [#allocation4], %s2082
      %s2084 = sshll.u32 [#allocation8], 4
      %s2085 = int_to_ptr.vmem [resolvable:$true] %s2084
      %2090 = dma.vmem_to_hbm [thread:$0]  %s2085, 256, %s5, [#allocation4], 128, 128, 8
    $region37: #{tpu_custom_call.1} parent=1 // pred_fallthru
      _
    // Predicated region
    $region38: #{tpu_custom_call.1} parent=1 // pred_check
      _
    $region39: #{tpu_custom_call.1} parent=1 // pred_check_branch
      %2092 = sbr.rel (0) target = $region41
    $region40: #{tpu_custom_call.1} parent=1 // pred_region
      %2093 = dma.done [#allocation4], 256
    $region41: #{tpu_custom_call.1} parent=1 // pred_fallthru
      _
    %2094 = vsyncpa [#allocation3], 1
    %2095 = vsyncpa [#allocation6], 1
    %2096 = vsyncpa [#allocation4], 1

</llo_original>
